<compile_context>
chip_gen: v7x
topology: tpu7x:2x2x1
jax: 0.10.0
libtpu: 0.0.40
codegen_flags: <defaults>
</compile_context>

<pallas_src>
import functools

import jax
import jax.numpy as jnp
from jax import lax
from jax.experimental import pallas as pl
from jax.experimental.pallas import tpu as pltpu


def resconv_kernel(top_ref, main_ref, bot_ref, w3_ref, beta_ref, bb_ref,
                   o_ref, xb3_ref, *, d, rc):
    # top_ref  : (d,  W, C)  bf16  rows just above the tile (clamped fetch at t == 0)
    # main_ref : (TH, W, C)  bf16  the tile's own rows (also the residual source)
    # bot_ref  : (d,  W, C)  bf16  rows just below the tile (clamped fetch at t == T-1)
    # w3_ref   : (3, 3C, C)  bf16  per-kh im2col weights (K axis = kw-major, ci-minor)
    # beta_ref : (1, C) f32        beta
    # bb_ref   : (1, C) f32        bias * beta (pre-folded in the wrapper)
    # o_ref    : (TH, W, C)  f32   output band
    # xb3_ref  : (TH+2d, W, 3C) bf16 scratch: band with the 3 kw shifts stacked on lanes
    TH, W, C = o_ref.shape
    t = pl.program_id(1)
    last_t = pl.num_programs(1) - 1

    # ---- Band assembly: fused column zero-padding + kw im2col, built once per step. ----
    def put_rows(rows, src):
        r = src.shape[0]
        zc = jnp.zeros((r, d, C), jnp.bfloat16)
        xb3_ref[rows, :, C:2 * C] = src                        # kw = 1 (aligned copy)
        xb3_ref[rows, d:W, 0:C] = src[:, 0:W - d, :]           # kw = 0 (shift right by d)
        xb3_ref[rows, 0:d, 0:C] = zc                           #   left column padding
        xb3_ref[rows, 0:W - d, 2 * C:3 * C] = src[:, d:W, :]   # kw = 2 (shift left by d)
        xb3_ref[rows, W - d:W, 2 * C:3 * C] = zc               #   right column padding

    put_rows(slice(0, d), top_ref[...])
    put_rows(slice(d, d + TH), main_ref[...])
    put_rows(slice(TH + d, TH + 2 * d), bot_ref[...])

    # Row zero-padding: first / last tile sees zeros instead of the clamped halo fetch.
    @pl.when(t == 0)
    def _():
        xb3_ref[0:d, :, :] = jnp.zeros((d, W, 3 * C), jnp.bfloat16)

    @pl.when(t == last_t)
    def _():
        xb3_ref[TH + d:TH + 2 * d, :, :] = jnp.zeros((d, W, 3 * C), jnp.bfloat16)

    beta_v = beta_ref[0]   # (C,)
    bb_v = bb_ref[0]       # (C,) == bias * beta

    # ---- Per row chunk: 3 MXU matmuls (K = 3C), f32 value-chain accumulation, fused
    #      epilogue, rows stored straight to o_ref (no accumulator scratch RMW). ----
    def chunk_body(ci, carry):
        r0 = pl.multiple_of(ci * rc, rc)
        acc = jnp.dot(xb3_ref[pl.ds(r0, rc)], w3_ref[0],
                      preferred_element_type=jnp.float32)
        acc = acc + jnp.dot(xb3_ref[pl.ds(r0 + d, rc)], w3_ref[1],
                            preferred_element_type=jnp.float32)
        acc = acc + jnp.dot(xb3_ref[pl.ds(r0 + 2 * d, rc)], w3_ref[2],
                            preferred_element_type=jnp.float32)
        res = main_ref[pl.ds(r0, rc)].astype(jnp.float32)      # aligned residual read
        y = acc * beta_v + bb_v + res
        y = jnp.where(y > 0, y, 0.2 * y)                       # LeakyReLU(0.2)
        o_ref[pl.ds(r0, rc)] = y.astype(o_ref.dtype)
        return carry

    lax.fori_loop(0, TH // rc, chunk_body, 0)


def _vmem_budget_and_limit():
    try:
        cap = int(pltpu.get_tpu_info().vmem_capacity_bytes)
    except Exception:                                   # no device / missing attr
        cap = 64 * 1024 * 1024                          # conservative (v7x per-TC size)
    budget = int(cap * 0.45)                            # tile-picking budget
    limit = min(int(cap * 0.75), 100 * 1024 * 1024)     # Mosaic scoped-VMEM limit
    return budget, limit


def _vmem_estimate_bytes(TH, W, C, d):
    main = TH * W * C * 2                 # bf16 activation block
    halo = 2 * d * W * C * 2              # top + bottom halo blocks
    out = TH * W * C * 4                  # f32 output block
    xb3 = (TH + 2 * d) * W * 3 * C * 2    # im2col scratch (single-buffered)
    w3 = 3 * 3 * C * C * 2                # constant index map -> single-buffered
    consts = 2 * C * 4
    return 2 * (main + halo + out) + xb3 + w3 + consts  # in/out blocks double-buffered


def _pick_tile_rows(H, W, C, d, budget_bytes):
    best = None
    th = d
    while th <= H:
        if H % th == 0 and _vmem_estimate_bytes(th, W, C, d) <= budget_bytes:
            best = th
        th += d
    assert best is not None, (
        "even the smallest legal row tile exceeds the VMEM budget; reduce W or C")
    return best


def _pick_chunk_rows(TH, max_rc=8):
    for rc in range(min(TH, max_rc), 0, -1):
        if TH % rc == 0:
            return rc
    return 1


def resconv_forward(x_nchw, weight, bias, beta, dilation=1, tile_rows=None):
    """ResConv forward: LeakyReLU(conv3x3(x) * beta + x, 0.2), padding == dilation.

    x_nchw: (N, C, H, W) f32; weight: (Cout=C, Cin=C, 3, 3); bias: (C,); beta: (1, C, 1, 1).
    """
    N, C, H, W = x_nchw.shape
    d = int(dilation)
    assert d >= 1 and W > d
    assert weight.shape == (C, C, 3, 3)
    assert H % d == 0, "H must be a multiple of the dilation for this row tiling"

    budget, vmem_limit = _vmem_budget_and_limit()
    TH = _pick_tile_rows(H, W, C, d, budget) if tile_rows is None else int(tile_rows)
    assert H % TH == 0 and TH % d == 0, "tile_rows must divide H and be a multiple of dilation"
    T = H // TH
    rc = _pick_chunk_rows(TH)
    rpt = TH // d              # halo block-index stride (halo blocks are d rows tall)
    n_hblk = H // d            # number of d-row blocks along H

    # Layout plumbing at the PyTorch NCHW boundary; bf16 cast fused into the transpose.
    x = jnp.transpose(x_nchw, (0, 2, 3, 1)).astype(jnp.bfloat16)          # (N, H, W, C)

    # (Cout, Cin, kh, kw) -> (kh, kw*Cin, Cout): one K=3C matmul per kh.
    w3 = jnp.transpose(weight, (2, 3, 1, 0)).reshape(3, 3 * C, C).astype(jnp.bfloat16)
    beta_v = beta.reshape(1, C).astype(jnp.float32)
    bias_beta = (bias.reshape(1, C) * beta.reshape(1, C)).astype(jnp.float32)

    cost = pl.CostEstimate(
        flops=2 * 9 * N * H * W * C * C,
        transcendentals=0,
        bytes_accessed=N * H * W * C * (2 + 4) + 9 * C * C * 2)

    out_nhwc = pl.pallas_call(
        functools.partial(resconv_kernel, d=d, rc=rc),
        out_shape=jax.ShapeDtypeStruct((N, H, W, C), jnp.float32),
        grid_spec=pltpu.PrefetchScalarGridSpec(
            num_scalar_prefetch=0,
            grid=(N, T),
            in_specs=[
                # d halo rows above the tile (clamped at the top edge; zeroed when t == 0).
                pl.BlockSpec((None, d, W, C),
                             lambda n, t: (n, jnp.maximum(t * rpt - 1, 0), 0, 0)),
                # The tile's own TH rows (conv centre taps + residual).
                pl.BlockSpec((None, TH, W, C), lambda n, t: (n, t, 0, 0)),
                # d halo rows below (clamped at the bottom edge; zeroed when t == T-1).
                pl.BlockSpec((None, d, W, C),
                             lambda n, t: (n, jnp.minimum((t + 1) * rpt, n_hblk - 1), 0, 0)),
                # Weights / beta / bias*beta: constant index maps -> stay VMEM-resident.
                pl.BlockSpec((3, 3 * C, C), lambda n, t: (0, 0, 0)),
                pl.BlockSpec((1, C), lambda n, t: (0, 0)),
                pl.BlockSpec((1, C), lambda n, t: (0, 0)),
            ],
            out_specs=pl.BlockSpec((None, TH, W, C), lambda n, t: (n, t, 0, 0)),
            scratch_shapes=[
                pltpu.VMEM((TH + 2 * d, W, 3 * C), jnp.bfloat16),   # im2col band
            ],
        ),
        compiler_params=pltpu.CompilerParams(
            dimension_semantics=("parallel", "parallel"),
            vmem_limit_bytes=vmem_limit,
        ),
        cost_estimate=cost,
    )(x, x, x, w3, beta_v, bias_beta)

    return jnp.transpose(out_nhwc, (0, 3, 1, 2))                          # NHWC -> NCHW


def reference_forward(x_nchw, weight, bias, beta, dilation=1):
    """Pure-JAX f32 reference (lax conv) for correctness checking."""
    y = jax.lax.conv_general_dilated(
        x_nchw, weight,
        window_strides=(1, 1),
        padding=((dilation, dilation), (dilation, dilation)),
        rhs_dilation=(dilation, dilation),
        dimension_numbers=("NCHW", "OIHW", "NCHW"),
    ) + bias.reshape(1, -1, 1, 1)
    y = y * beta + x_nchw
    return jnp.where(y > 0, y, 0.2 * y)


if __name__ == "__main__":
    key = jax.random.PRNGKey(0)
    N, C, H, W = 2, 4, 16, 16

    k_x, k_w, k_b, k_bt = jax.random.split(key, 4)
    x = jax.random.normal(k_x, (N, C, H, W), dtype=jnp.float32)
    # Synthetic parameters with shapes from nn.Conv2d(c, c, 3, 1, d, dilation=d) + beta.
    weight = jax.random.normal(k_w, (C, C, 3, 3), dtype=jnp.float32) * 0.1
    bias = jax.random.normal(k_b, (C,), dtype=jnp.float32) * 0.1
    beta = 1.0 + 0.1 * jax.random.normal(k_bt, (1, C, 1, 1), dtype=jnp.float32)

    # (dilation, tile_rows): multi-tile halo path (d=1, d=2) and the auto-picked single-tile path.
    for dilation, tile_rows in ((1, 8), (2, 8), (1, None)):
        fwd = jax.jit(functools.partial(resconv_forward, dilation=dilation, tile_rows=tile_rows))
        out = jax.block_until_ready(fwd(x, weight, bias, beta))
        ref = reference_forward(x, weight, bias, beta, dilation)
        assert out.shape == (N, C, H, W)
        max_err = float(jnp.max(jnp.abs(out - ref)))
        # bf16 activations/weights with f32 accumulation -> loosened tolerance vs f32 reference.
        assert jnp.allclose(out, ref, atol=2e-2, rtol=2e-2), (
            f"mismatch vs reference (dilation={dilation}, tile_rows={tile_rows}, "
            f"max abs err {max_err})")

    print("KERNEL_OK")
</pallas_src>

<mosaic_0001>
module attributes {stable_mosaic.version = 11 : i64} {
  func.func @resconv_kernel(%arg0: i32, %arg1: i32, %arg2: memref<1x1x16x4xbf16, #tpu.memory_space<vmem>>, %arg3: memref<1x8x16x4xbf16, #tpu.memory_space<vmem>>, %arg4: memref<1x1x16x4xbf16, #tpu.memory_space<vmem>>, %arg5: memref<3x12x4xbf16, #tpu.memory_space<vmem>>, %arg6: memref<1x4xf32, #tpu.memory_space<vmem>>, %arg7: memref<1x4xf32, #tpu.memory_space<vmem>>, %arg8: memref<1x8x16x4xf32, #tpu.memory_space<vmem>>, %arg9: memref<10x16x12xbf16, #tpu.memory_space<vmem>>) attributes {dimension_semantics = [#tpu.dimension_semantics<parallel>, #tpu.dimension_semantics<parallel>], iteration_bounds = array<i64: 2, 2>, scalar_prefetch = 0 : i64, scratch_operands = 1 : i64, tpu.core_type = #tpu.core_type<tc>, window_params = [{transform_indices = @transform_0, window_bounds = array<i64: 1, 1, 16, 4>}, {transform_indices = @transform_1, window_bounds = array<i64: 1, 8, 16, 4>}, {transform_indices = @transform_2, window_bounds = array<i64: 1, 1, 16, 4>}, {pipeline_mode = #tpu.pipeline_mode<synchronous>, transform_indices = @transform_3, window_bounds = array<i64: 3, 12, 4>}, {pipeline_mode = #tpu.pipeline_mode<synchronous>, transform_indices = @transform_4, window_bounds = array<i64: 1, 4>}, {pipeline_mode = #tpu.pipeline_mode<synchronous>, transform_indices = @transform_5, window_bounds = array<i64: 1, 4>}, {transform_indices = @transform_6, window_bounds = array<i64: 1, 8, 16, 4>}]} {
    %c0 = arith.constant 0 : index
    %c0_0 = arith.constant 0 : index
    %c0_1 = arith.constant 0 : index
    %c0_2 = arith.constant 0 : index
    %0 = vector.load %arg2[%c0, %c0_0, %c0_1, %c0_2] : memref<1x1x16x4xbf16, #tpu.memory_space<vmem>>, vector<1x1x16x4xbf16>
    %1 = vector.shape_cast %0 : vector<1x1x16x4xbf16> to vector<1x16x4xbf16>
    %cst = arith.constant 0.000000e+00 : bf16
    %2 = vector.broadcast %cst : bf16 to vector<1x1x4xbf16>
    %c0_3 = arith.constant 0 : index
    %c0_4 = arith.constant 0 : index
    %c4 = arith.constant 4 : index
    %3 = vector.load %arg9[%c0_3, %c0_4, %c4] : memref<10x16x12xbf16, #tpu.memory_space<vmem>>, vector<1x16x4xbf16>
    tpu.vector_store %arg9[%c0_3, %c0_4, %c4], %1 {strides = array<i32>} : memref<10x16x12xbf16, #tpu.memory_space<vmem>>, vector<1x16x4xbf16>,
    %4 = vector.extract_strided_slice %1 {offsets = [0, 0, 0], sizes = [1, 15, 4], strides = [1, 1, 1]} : vector<1x16x4xbf16> to vector<1x15x4xbf16>
    %c0_5 = arith.constant 0 : index
    %c1 = arith.constant 1 : index
    %c0_6 = arith.constant 0 : index
    %5 = vector.load %arg9[%c0_5, %c1, %c0_6] : memref<10x16x12xbf16, #tpu.memory_space<vmem>>, vector<1x15x4xbf16>
    tpu.vector_store %arg9[%c0_5, %c1, %c0_6], %4 {strides = array<i32>} : memref<10x16x12xbf16, #tpu.memory_space<vmem>>, vector<1x15x4xbf16>,
    %c0_7 = arith.constant 0 : index
    %c0_8 = arith.constant 0 : index
    %c0_9 = arith.constant 0 : index
    %6 = vector.load %arg9[%c0_7, %c0_8, %c0_9] : memref<10x16x12xbf16, #tpu.memory_space<vmem>>, vector<1x1x4xbf16>
    tpu.vector_store %arg9[%c0_7, %c0_8, %c0_9], %2 {strides = array<i32>} : memref<10x16x12xbf16, #tpu.memory_space<vmem>>, vector<1x1x4xbf16>,
    %7 = vector.extract_strided_slice %1 {offsets = [0, 1, 0], sizes = [1, 15, 4], strides = [1, 1, 1]} : vector<1x16x4xbf16> to vector<1x15x4xbf16>
    %c0_10 = arith.constant 0 : index
    %c0_11 = arith.constant 0 : index
    %c8 = arith.constant 8 : index
    %8 = vector.load %arg9[%c0_10, %c0_11, %c8] : memref<10x16x12xbf16, #tpu.memory_space<vmem>>, vector<1x15x4xbf16>
    tpu.vector_store %arg9[%c0_10, %c0_11, %c8], %7 {strides = array<i32>} : memref<10x16x12xbf16, #tpu.memory_space<vmem>>, vector<1x15x4xbf16>,
    %c0_12 = arith.constant 0 : index
    %c15 = arith.constant 15 : index
    %c8_13 = arith.constant 8 : index
    %9 = vector.load %arg9[%c0_12, %c15, %c8_13] : memref<10x16x12xbf16, #tpu.memory_space<vmem>>, vector<1x1x4xbf16>
    tpu.vector_store %arg9[%c0_12, %c15, %c8_13], %2 {strides = array<i32>} : memref<10x16x12xbf16, #tpu.memory_space<vmem>>, vector<1x1x4xbf16>,
    %c0_14 = arith.constant 0 : index
    %c0_15 = arith.constant 0 : index
    %c0_16 = arith.constant 0 : index
    %c0_17 = arith.constant 0 : index
    %10 = vector.load %arg3[%c0_14, %c0_15, %c0_16, %c0_17] : memref<1x8x16x4xbf16, #tpu.memory_space<vmem>>, vector<1x8x16x4xbf16>
    %11 = vector.shape_cast %10 : vector<1x8x16x4xbf16> to vector<8x16x4xbf16>
    %cst_18 = arith.constant 0.000000e+00 : bf16
    %12 = vector.broadcast %cst_18 : bf16 to vector<8x1x4xbf16>
    %c1_19 = arith.constant 1 : index
    %c0_20 = arith.constant 0 : index
    %c4_21 = arith.constant 4 : index
    %13 = vector.load %arg9[%c1_19, %c0_20, %c4_21] : memref<10x16x12xbf16, #tpu.memory_space<vmem>>, vector<8x16x4xbf16>
    tpu.vector_store %arg9[%c1_19, %c0_20, %c4_21], %11 {strides = array<i32>} : memref<10x16x12xbf16, #tpu.memory_space<vmem>>, vector<8x16x4xbf16>,
    %14 = vector.extract_strided_slice %11 {offsets = [0, 0, 0], sizes = [8, 15, 4], strides = [1, 1, 1]} : vector<8x16x4xbf16> to vector<8x15x4xbf16>
    %c1_22 = arith.constant 1 : index
    %c1_23 = arith.constant 1 : index
    %c0_24 = arith.constant 0 : index
    %15 = vector.load %arg9[%c1_22, %c1_23, %c0_24] : memref<10x16x12xbf16, #tpu.memory_space<vmem>>, vector<8x15x4xbf16>
    tpu.vector_store %arg9[%c1_22, %c1_23, %c0_24], %14 {strides = array<i32>} : memref<10x16x12xbf16, #tpu.memory_space<vmem>>, vector<8x15x4xbf16>,
    %c1_25 = arith.constant 1 : index
    %c0_26 = arith.constant 0 : index
    %c0_27 = arith.constant 0 : index
    %16 = vector.load %arg9[%c1_25, %c0_26, %c0_27] : memref<10x16x12xbf16, #tpu.memory_space<vmem>>, vector<8x1x4xbf16>
    tpu.vector_store %arg9[%c1_25, %c0_26, %c0_27], %12 {strides = array<i32>} : memref<10x16x12xbf16, #tpu.memory_space<vmem>>, vector<8x1x4xbf16>,
    %17 = vector.extract_strided_slice %11 {offsets = [0, 1, 0], sizes = [8, 15, 4], strides = [1, 1, 1]} : vector<8x16x4xbf16> to vector<8x15x4xbf16>
    %c1_28 = arith.constant 1 : index
    %c0_29 = arith.constant 0 : index
    %c8_30 = arith.constant 8 : index
    %18 = vector.load %arg9[%c1_28, %c0_29, %c8_30] : memref<10x16x12xbf16, #tpu.memory_space<vmem>>, vector<8x15x4xbf16>
    tpu.vector_store %arg9[%c1_28, %c0_29, %c8_30], %17 {strides = array<i32>} : memref<10x16x12xbf16, #tpu.memory_space<vmem>>, vector<8x15x4xbf16>,
    %c1_31 = arith.constant 1 : index
    %c15_32 = arith.constant 15 : index
    %c8_33 = arith.constant 8 : index
    %19 = vector.load %arg9[%c1_31, %c15_32, %c8_33] : memref<10x16x12xbf16, #tpu.memory_space<vmem>>, vector<8x1x4xbf16>
    tpu.vector_store %arg9[%c1_31, %c15_32, %c8_33], %12 {strides = array<i32>} : memref<10x16x12xbf16, #tpu.memory_space<vmem>>, vector<8x1x4xbf16>,
    %c0_34 = arith.constant 0 : index
    %c0_35 = arith.constant 0 : index
    %c0_36 = arith.constant 0 : index
    %c0_37 = arith.constant 0 : index
    %20 = vector.load %arg4[%c0_34, %c0_35, %c0_36, %c0_37] : memref<1x1x16x4xbf16, #tpu.memory_space<vmem>>, vector<1x1x16x4xbf16>
    %21 = vector.shape_cast %20 : vector<1x1x16x4xbf16> to vector<1x16x4xbf16>
    %cst_38 = arith.constant 0.000000e+00 : bf16
    %22 = vector.broadcast %cst_38 : bf16 to vector<1x1x4xbf16>
    %c9 = arith.constant 9 : index
    %c0_39 = arith.constant 0 : index
    %c4_40 = arith.constant 4 : index
    %23 = vector.load %arg9[%c9, %c0_39, %c4_40] : memref<10x16x12xbf16, #tpu.memory_space<vmem>>, vector<1x16x4xbf16>
    tpu.vector_store %arg9[%c9, %c0_39, %c4_40], %21 {strides = array<i32>} : memref<10x16x12xbf16, #tpu.memory_space<vmem>>, vector<1x16x4xbf16>,
    %24 = vector.extract_strided_slice %21 {offsets = [0, 0, 0], sizes = [1, 15, 4], strides = [1, 1, 1]} : vector<1x16x4xbf16> to vector<1x15x4xbf16>
    %c9_41 = arith.constant 9 : index
    %c1_42 = arith.constant 1 : index
    %c0_43 = arith.constant 0 : index
    %25 = vector.load %arg9[%c9_41, %c1_42, %c0_43] : memref<10x16x12xbf16, #tpu.memory_space<vmem>>, vector<1x15x4xbf16>
    tpu.vector_store %arg9[%c9_41, %c1_42, %c0_43], %24 {strides = array<i32>} : memref<10x16x12xbf16, #tpu.memory_space<vmem>>, vector<1x15x4xbf16>,
    %c9_44 = arith.constant 9 : index
    %c0_45 = arith.constant 0 : index
    %c0_46 = arith.constant 0 : index
    %26 = vector.load %arg9[%c9_44, %c0_45, %c0_46] : memref<10x16x12xbf16, #tpu.memory_space<vmem>>, vector<1x1x4xbf16>
    tpu.vector_store %arg9[%c9_44, %c0_45, %c0_46], %22 {strides = array<i32>} : memref<10x16x12xbf16, #tpu.memory_space<vmem>>, vector<1x1x4xbf16>,
    %27 = vector.extract_strided_slice %21 {offsets = [0, 1, 0], sizes = [1, 15, 4], strides = [1, 1, 1]} : vector<1x16x4xbf16> to vector<1x15x4xbf16>
    %c9_47 = arith.constant 9 : index
    %c0_48 = arith.constant 0 : index
    %c8_49 = arith.constant 8 : index
    %28 = vector.load %arg9[%c9_47, %c0_48, %c8_49] : memref<10x16x12xbf16, #tpu.memory_space<vmem>>, vector<1x15x4xbf16>
    tpu.vector_store %arg9[%c9_47, %c0_48, %c8_49], %27 {strides = array<i32>} : memref<10x16x12xbf16, #tpu.memory_space<vmem>>, vector<1x15x4xbf16>,
    %c9_50 = arith.constant 9 : index
    %c15_51 = arith.constant 15 : index
    %c8_52 = arith.constant 8 : index
    %29 = vector.load %arg9[%c9_50, %c15_51, %c8_52] : memref<10x16x12xbf16, #tpu.memory_space<vmem>>, vector<1x1x4xbf16>
    tpu.vector_store %arg9[%c9_50, %c15_51, %c8_52], %22 {strides = array<i32>} : memref<10x16x12xbf16, #tpu.memory_space<vmem>>, vector<1x1x4xbf16>,
    %c0_i32 = arith.constant 0 : i32
    %30 = arith.cmpi eq, %arg1, %c0_i32 : i32
    %31 = arith.extui %30 : i1 to i32
    %c0_i32_53 = arith.constant 0 : i32
    %32 = arith.cmpi ne, %31, %c0_i32_53 : i32
    scf.if %32 {
      %cst_87 = arith.constant 0.000000e+00 : bf16
      %81 = vector.broadcast %cst_87 : bf16 to vector<1x16x12xbf16>
      %c0_88 = arith.constant 0 : index
      %c0_89 = arith.constant 0 : index
      %c0_90 = arith.constant 0 : index
      %82 = vector.load %arg9[%c0_88, %c0_89, %c0_90] : memref<10x16x12xbf16, #tpu.memory_space<vmem>>, vector<1x16x12xbf16>
      tpu.vector_store %arg9[%c0_88, %c0_89, %c0_90], %81 {strides = array<i32>} : memref<10x16x12xbf16, #tpu.memory_space<vmem>>, vector<1x16x12xbf16>,
    } else {
    }
    %c1_i32 = arith.constant 1 : i32
    %33 = arith.cmpi eq, %arg1, %c1_i32 : i32
    %34 = arith.extui %33 : i1 to i32
    %c0_i32_54 = arith.constant 0 : i32
    %35 = arith.cmpi ne, %34, %c0_i32_54 : i32
    scf.if %35 {
      %cst_87 = arith.constant 0.000000e+00 : bf16
      %81 = vector.broadcast %cst_87 : bf16 to vector<1x16x12xbf16>
      %c9_88 = arith.constant 9 : index
      %c0_89 = arith.constant 0 : index
      %c0_90 = arith.constant 0 : index
      %82 = vector.load %arg9[%c9_88, %c0_89, %c0_90] : memref<10x16x12xbf16, #tpu.memory_space<vmem>>, vector<1x16x12xbf16>
      tpu.vector_store %arg9[%c9_88, %c0_89, %c0_90], %81 {strides = array<i32>} : memref<10x16x12xbf16, #tpu.memory_space<vmem>>, vector<1x16x12xbf16>,
    } else {
    }
    %c0_55 = arith.constant 0 : index
    %c0_56 = arith.constant 0 : index
    %36 = vector.load %arg6[%c0_55, %c0_56] : memref<1x4xf32, #tpu.memory_space<vmem>>, vector<1x4xf32>
    %37 = vector.shape_cast %36 : vector<1x4xf32> to vector<4xf32>
    %c0_57 = arith.constant 0 : index
    %c0_58 = arith.constant 0 : index
    %38 = vector.load %arg7[%c0_57, %c0_58] : memref<1x4xf32, #tpu.memory_space<vmem>>, vector<1x4xf32>
    %39 = vector.shape_cast %38 : vector<1x4xf32> to vector<4xf32>
    %c0_i32_59 = arith.constant 0 : i32
    %c8_i32 = arith.constant 8 : i32
    %40 = arith.muli %c0_i32_59, %c8_i32 : i32
    %41 = tpu.assume_multiple %40, 8 : i32
    %42 = arith.index_cast %41 : i32 to index
    %c0_60 = arith.constant 0 : index
    %c0_61 = arith.constant 0 : index
    %43 = vector.load %arg9[%42, %c0_60, %c0_61] : memref<10x16x12xbf16, #tpu.memory_space<vmem>>, vector<8x16x12xbf16>
    %c0_62 = arith.constant 0 : index
    %c0_63 = arith.constant 0 : index
    %c0_64 = arith.constant 0 : index
    %44 = vector.load %arg5[%c0_62, %c0_63, %c0_64] : memref<3x12x4xbf16, #tpu.memory_space<vmem>>, vector<1x12x4xbf16>
    %45 = vector.shape_cast %44 : vector<1x12x4xbf16> to vector<12x4xbf16>
    %cst_65 = arith.constant dense<0.000000e+00> : vector<8x16x4xf32>
    %46 = tpu.matmul %43, %45, %cst_65 {dimension_numbers = #tpu.dot_dimension_numbers<[2], [0], [0, 1], [1], [0, 0, 0, 1, 1, 1], [], []>} : vector<8x16x12xbf16>, vector<12x4xbf16>, vector<8x16x4xf32> -> vector<8x16x4xf32>
    %c1_i32_66 = arith.constant 1 : i32
    %47 = arith.addi %41, %c1_i32_66 : i32
    %48 = arith.index_cast %47 : i32 to index
    %c0_67 = arith.constant 0 : index
    %c0_68 = arith.constant 0 : index
    %49 = vector.load %arg9[%48, %c0_67, %c0_68] : memref<10x16x12xbf16, #tpu.memory_space<vmem>>, vector<8x16x12xbf16>
    %c1_69 = arith.constant 1 : index
    %c0_70 = arith.constant 0 : index
    %c0_71 = arith.constant 0 : index
    %50 = vector.load %arg5[%c1_69, %c0_70, %c0_71] : memref<3x12x4xbf16, #tpu.memory_space<vmem>>, vector<1x12x4xbf16>
    %51 = vector.shape_cast %50 : vector<1x12x4xbf16> to vector<12x4xbf16>
    %cst_72 = arith.constant dense<0.000000e+00> : vector<8x16x4xf32>
    %52 = tpu.matmul %49, %51, %cst_72 {dimension_numbers = #tpu.dot_dimension_numbers<[2], [0], [0, 1], [1], [0, 0, 0, 1, 1, 1], [], []>} : vector<8x16x12xbf16>, vector<12x4xbf16>, vector<8x16x4xf32> -> vector<8x16x4xf32>
    %53 = arith.addf %46, %52 : vector<8x16x4xf32>
    %c2_i32 = arith.constant 2 : i32
    %54 = arith.addi %41, %c2_i32 : i32
    %55 = arith.index_cast %54 : i32 to index
    %c0_73 = arith.constant 0 : index
    %c0_74 = arith.constant 0 : index
    %56 = vector.load %arg9[%55, %c0_73, %c0_74] : memref<10x16x12xbf16, #tpu.memory_space<vmem>>, vector<8x16x12xbf16>
    %c2 = arith.constant 2 : index
    %c0_75 = arith.constant 0 : index
    %c0_76 = arith.constant 0 : index
    %57 = vector.load %arg5[%c2, %c0_75, %c0_76] : memref<3x12x4xbf16, #tpu.memory_space<vmem>>, vector<1x12x4xbf16>
    %58 = vector.shape_cast %57 : vector<1x12x4xbf16> to vector<12x4xbf16>
    %cst_77 = arith.constant dense<0.000000e+00> : vector<8x16x4xf32>
    %59 = tpu.matmul %56, %58, %cst_77 {dimension_numbers = #tpu.dot_dimension_numbers<[2], [0], [0, 1], [1], [0, 0, 0, 1, 1, 1], [], []>} : vector<8x16x12xbf16>, vector<12x4xbf16>, vector<8x16x4xf32> -> vector<8x16x4xf32>
    %60 = arith.addf %53, %59 : vector<8x16x4xf32>
    %c0_78 = arith.constant 0 : index
    %61 = arith.index_cast %41 : i32 to index
    %c0_79 = arith.constant 0 : index
    %c0_80 = arith.constant 0 : index
    %62 = vector.load %arg3[%c0_78, %61, %c0_79, %c0_80] : memref<1x8x16x4xbf16, #tpu.memory_space<vmem>>, vector<1x8x16x4xbf16>
    %63 = vector.shape_cast %62 : vector<1x8x16x4xbf16> to vector<8x16x4xbf16>
    %64 = arith.extf %63 : vector<8x16x4xbf16> to vector<8x16x4xf32>
    %65 = vector.shape_cast %37 : vector<4xf32> to vector<1x1x4xf32>
    %66 = vector.broadcast %65 : vector<1x1x4xf32> to vector<8x16x4xf32>
    %67 = arith.mulf %60, %66 : vector<8x16x4xf32>
    %68 = vector.shape_cast %39 : vector<4xf32> to vector<1x1x4xf32>
    %69 = vector.broadcast %68 : vector<1x1x4xf32> to vector<8x16x4xf32>
    %70 = arith.addf %67, %69 : vector<8x16x4xf32>
    %71 = arith.addf %70, %64 : vector<8x16x4xf32>
    %cst_81 = arith.constant 0.000000e+00 : f32
    %72 = vector.broadcast %cst_81 : f32 to vector<8x16x4xf32>
    %73 = arith.cmpf ogt, %71, %72 : vector<8x16x4xf32>
    %cst_82 = arith.constant 2.000000e-01 : f32
    %74 = vector.broadcast %cst_82 : f32 to vector<8x16x4xf32>
    %75 = arith.mulf %74, %71 : vector<8x16x4xf32>
    %76 = arith.select %73, %71, %75 : vector<8x16x4xi1>, vector<8x16x4xf32>
    %c0_83 = arith.constant 0 : index
    %77 = arith.index_cast %41 : i32 to index
    %c0_84 = arith.constant 0 : index
    %c0_85 = arith.constant 0 : index
    %78 = vector.load %arg8[%c0_83, %77, %c0_84, %c0_85] : memref<1x8x16x4xf32, #tpu.memory_space<vmem>>, vector<1x8x16x4xf32>
    %79 = vector.shape_cast %78 : vector<1x8x16x4xf32> to vector<8x16x4xf32>
    %80 = vector.shape_cast %76 : vector<8x16x4xf32> to vector<1x8x16x4xf32>
    tpu.vector_store %arg8[%c0_83, %77, %c0_84, %c0_85], %80 {strides = array<i32>} : memref<1x8x16x4xf32, #tpu.memory_space<vmem>>, vector<1x8x16x4xf32>,
    %c1_i32_86 = arith.constant 1 : i32
    return
  }
  func.func @transform_0(%arg0: i32, %arg1: i32) -> (i32, i32, i32, i32) {
    %c8_i32 = arith.constant 8 : i32
    %0 = arith.muli %arg1, %c8_i32 : i32
    %c1_i32 = arith.constant 1 : i32
    %1 = arith.subi %0, %c1_i32 : i32
    %c0_i32 = arith.constant 0 : i32
    %2 = arith.maxsi %1, %c0_i32 : i32
    %c0_i32_0 = arith.constant 0 : i32
    %c0_i32_1 = arith.constant 0 : i32
    %c0_i32_2 = arith.constant 0 : i32
    return %arg0, %2, %c0_i32_0, %c0_i32_1 : i32, i32, i32, i32
  }
  func.func @transform_1(%arg0: i32, %arg1: i32) -> (i32, i32, i32, i32) {
    %c0_i32 = arith.constant 0 : i32
    %c0_i32_0 = arith.constant 0 : i32
    %c0_i32_1 = arith.constant 0 : i32
    return %arg0, %arg1, %c0_i32, %c0_i32_0 : i32, i32, i32, i32
  }
  func.func @transform_2(%arg0: i32, %arg1: i32) -> (i32, i32, i32, i32) {
    %c1_i32 = arith.constant 1 : i32
    %0 = arith.addi %arg1, %c1_i32 : i32
    %c8_i32 = arith.constant 8 : i32
    %1 = arith.muli %0, %c8_i32 : i32
    %c15_i32 = arith.constant 15 : i32
    %2 = arith.minsi %1, %c15_i32 : i32
    %c0_i32 = arith.constant 0 : i32
    %c0_i32_0 = arith.constant 0 : i32
    %c0_i32_1 = arith.constant 0 : i32
    return %arg0, %2, %c0_i32, %c0_i32_0 : i32, i32, i32, i32
  }
  func.func @transform_3(%arg0: i32, %arg1: i32) -> (i32, i32, i32) {
    %c0_i32 = arith.constant 0 : i32
    %c0_i32_0 = arith.constant 0 : i32
    %c0_i32_1 = arith.constant 0 : i32
    %c0_i32_2 = arith.constant 0 : i32
    return %c0_i32, %c0_i32_0, %c0_i32_1 : i32, i32, i32
  }
  func.func @transform_4(%arg0: i32, %arg1: i32) -> (i32, i32) {
    %c0_i32 = arith.constant 0 : i32
    %c0_i32_0 = arith.constant 0 : i32
    %c0_i32_1 = arith.constant 0 : i32
    return %c0_i32, %c0_i32_0 : i32, i32
  }
  func.func @transform_5(%arg0: i32, %arg1: i32) -> (i32, i32) {
    %c0_i32 = arith.constant 0 : i32
    %c0_i32_0 = arith.constant 0 : i32
    %c0_i32_1 = arith.constant 0 : i32
    return %c0_i32, %c0_i32_0 : i32, i32
  }
  func.func @transform_6(%arg0: i32, %arg1: i32) -> (i32, i32, i32, i32) {
    %c0_i32 = arith.constant 0 : i32
    %c0_i32_0 = arith.constant 0 : i32
    %c0_i32_1 = arith.constant 0 : i32
    return %arg0, %arg1, %c0_i32, %c0_i32_0 : i32, i32, i32, i32
  }
}

</mosaic_0001>

<llo_original>
// kernel: resconv_forward.1
$region0: #{resconv_forward.1}
  #allocation0 [shape = 'u32[]', space=smem, size = 0x4, offset = 0x4, fixed_abs, tag = 'smem constant byte address 0x4 - core index']
  #allocation1 [shape = 'u32[144,128]{1,0:T(1,128)}', space=vmem, size = 0x12000, scoped, tag = 'internal scratch']
  #allocation2 [shape = 'bf16[10,16,12]{2,1,0:T(16,128)(2,1)}', space=vmem, size = 0xa000, scoped, tag = 'scratch operand']
  %s0 = inlined_call_operand.vmem [shape: bf16[2,16,16,4], index: 0, kind: input, shape index: {}, may-alias: {0,1,2}]
  %s1 = inlined_call_operand.vmem [shape: bf16[2,16,16,4], index: 1, kind: input, shape index: {}, may-alias: {0,1,2}]
  %s2 = inlined_call_operand.vmem [shape: bf16[2,16,16,4], index: 2, kind: input, shape index: {}, may-alias: {0,1,2}]
  %s3 = inlined_call_operand.vmem [shape: bf16[3,12,4], index: 3, kind: input, shape index: {}]
  %s4 = inlined_call_operand.vmem [shape: f32[1,4], index: 4, kind: input, shape index: {}]
  %s5 = inlined_call_operand.vmem [shape: f32[1,4], index: 5, kind: input, shape index: {}]
  %s6 = inlined_call_operand.vmem [shape: f32[2,16,16,4], index: 6, kind: output, shape index: {}]
  %s7 = sld [smem:[#allocation0]]
  $region65: #{resconv_forward.1} parent=0
    _
  %s9 = ssub.s32 1, %s7
  %s10 = scalar_select 0, %s9, %s7
  loop: start=0, step=1, limit=6
  $region2: #{resconv_forward.1} parent=0 // loop_pre_header
    _
  $region3: #{resconv_forward.1} parent=0 // loop_header
    %s12 = sphi 0, %s16
    %p13 = scmp.ge.s32.totalorder %s12, 6
    %s19 = sphi 0, %s31
    %s20 = sphi 0, %s27
    %s21 = sphi 0, %s19
    %s22 = sphi 0, %s20
    %s23 = sphi 0, %s21
    %s24 = sphi 0, %s22
    %s44 = sphi 0, %s46
    %s47 = sphi 0, %s44
    %s48 = sphi 0, %s47
    %s64 = sphi 0, %s48
    %s72 = sphi 0, %s74
    %s75 = sphi 0, %s72
    %s76 = sphi 0, %s75
    %s92 = sphi 0, %s76
    %s108 = sphi 0, %s110
    %s111 = sphi 0, %s108
    %s112 = sphi 0, %s111
    %s128 = sphi 0, %s112
    %s132 = sphi 0, %s132
    %s134 = sphi 0, %s132
    %s135 = sphi 0, %s134
    %s149 = sphi 0, %s135
    %s153 = sphi 0, %s153
    %s155 = sphi 0, %s153
    %s156 = sphi 0, %s155
    %s170 = sphi 0, %s156
    %s174 = sphi 0, %s174
    %s176 = sphi 0, %s174
    %s177 = sphi 0, %s176
    %s191 = sphi 0, %s177
    %s199 = sphi 0, %s201
    %s202 = sphi 0, %s199
    %s203 = sphi 0, %s202
    %s219 = sphi 0, %s203
  $region4: #{resconv_forward.1} parent=0 // loop_header_branch
    %15 = sbr.rel (%p13) target = $region8
  $region5: #{resconv_forward.1} parent=0 // loop_body
    %s17 = ssub.s32 %s12, 1
    %s18 = ssub.s32 %s12, 2
    %s25 = sadd.s32 1, %s20
    %p26 = scmp.ge.s32.totalorder %s25, 2
    %s27 = scalar_select %p26, 0, %s25
    %s28 = sadd.s32 1, %s19
    %s29 = scalar_select %p26, %s28, %s19
    %p30 = scmp.ge.s32.totalorder %s29, 2
    %s31 = scalar_select %p30, 0, %s29
    %s32 = smul.u32 %s20, 8
    %s33 = ssub.s32 %s32, 1
    %p34 = scmp.gt.s32.totalorder %s33, 0
    %s35 = scalar_select %p34, %s33, 0
    %s36 = smul.u32 %s27, 8
    %s37 = ssub.s32 %s36, 1
    %p38 = scmp.gt.s32.totalorder %s37, 0
    %s39 = scalar_select %p38, %s37, 0
    %s40 = ssub.s32 %s19, %s31
    %s41 = ssub.s32 %s35, %s39
    %s42 = sor.u32 %s40, %s41
    %p43 = scmp.eq.s32.totalorder %s42, 0
    %s45 = sadd.s32 %s44, 1
    %s46 = scalar_select %p43, %s44, %s45
    %p49 = pneg %p43
    %p50 = scmp.eq.s32.totalorder %s12, 3
    %p51 = por %p49, %p50
    %p52 = scmp.ne.s32.totalorder %s44, %s47
    %p53 = scmp.eq.s32.totalorder %s12, 0
    %p54 = por %p52, %p53
    %p55 = scmp.ne.s32.totalorder %s44, %s47
    %p56 = scmp.eq.s32.totalorder %s17, 3
    %p57 = por %p55, %p56
    %p58 = scmp.ne.s32.totalorder %s47, %s48
    %p59 = scmp.eq.s32.totalorder %s17, 0
    %p60 = por %p58, %p59
    %p61 = scmp.ne.s32.totalorder %s47, %s48
    %p62 = scmp.eq.s32.totalorder %s18, 3
    %p63 = por %p61, %p62
    %p65 = scmp.ne.s32.totalorder %s48, %s64
    %p66 = scmp.eq.s32.totalorder %s18, 0
    %p67 = por %p65, %p66
    %s68 = ssub.s32 %s19, %s31
    %s69 = ssub.s32 %s20, %s27
    %s70 = sor.u32 %s68, %s69
    %p71 = scmp.eq.s32.totalorder %s70, 0
    %s73 = sadd.s32 %s72, 1
    %s74 = scalar_select %p71, %s72, %s73
    %p77 = pneg %p71
    %p78 = scmp.eq.s32.totalorder %s12, 3
    %p79 = por %p77, %p78
    %p80 = scmp.ne.s32.totalorder %s72, %s75
    %p81 = scmp.eq.s32.totalorder %s12, 0
    %p82 = por %p80, %p81
    %p83 = scmp.ne.s32.totalorder %s72, %s75
    %p84 = scmp.eq.s32.totalorder %s17, 3
    %p85 = por %p83, %p84
    %p86 = scmp.ne.s32.totalorder %s75, %s76
    %p87 = scmp.eq.s32.totalorder %s17, 0
    %p88 = por %p86, %p87
    %p89 = scmp.ne.s32.totalorder %s75, %s76
    %p90 = scmp.eq.s32.totalorder %s18, 3
    %p91 = por %p89, %p90
    %p93 = scmp.ne.s32.totalorder %s76, %s92
    %p94 = scmp.eq.s32.totalorder %s18, 0
    %p95 = por %p93, %p94
    %s96 = sadd.s32 %s20, 1
    %s97 = smul.u32 %s96, 8
    %p98 = scmp.lt.s32.totalorder %s97, 15
    %s99 = scalar_select %p98, %s97, 15
    %s100 = sadd.s32 %s27, 1
    %s101 = smul.u32 %s100, 8
    %p102 = scmp.lt.s32.totalorder %s101, 15
    %s103 = scalar_select %p102, %s101, 15
    %s104 = ssub.s32 %s19, %s31
    %s105 = ssub.s32 %s99, %s103
    %s106 = sor.u32 %s104, %s105
    %p107 = scmp.eq.s32.totalorder %s106, 0
    %s109 = sadd.s32 %s108, 1
    %s110 = scalar_select %p107, %s108, %s109
    %p113 = pneg %p107
    %p114 = scmp.eq.s32.totalorder %s12, 3
    %p115 = por %p113, %p114
    %p116 = scmp.ne.s32.totalorder %s108, %s111
    %p117 = scmp.eq.s32.totalorder %s12, 0
    %p118 = por %p116, %p117
    %p119 = scmp.ne.s32.totalorder %s108, %s111
    %p120 = scmp.eq.s32.totalorder %s17, 3
    %p121 = por %p119, %p120
    %p122 = scmp.ne.s32.totalorder %s111, %s112
    %p123 = scmp.eq.s32.totalorder %s17, 0
    %p124 = por %p122, %p123
    %p125 = scmp.ne.s32.totalorder %s111, %s112
    %p126 = scmp.eq.s32.totalorder %s18, 3
    %p127 = por %p125, %p126
    %p129 = scmp.ne.s32.totalorder %s112, %s128
    %p130 = scmp.eq.s32.totalorder %s18, 0
    %p131 = por %p129, %p130
    %s133 = sadd.s32 %s132, 1
    %p136 = scmp.eq.s32.totalorder %s12, 3
    %p137 = scmp.ne.s32.totalorder %s132, %s134
    %p138 = scmp.eq.s32.totalorder %s12, 0
    %p139 = por %p137, %p138
    %p140 = scmp.ne.s32.totalorder %s132, %s134
    %p141 = scmp.eq.s32.totalorder %s17, 3
    %p142 = por %p140, %p141
    %p143 = scmp.ne.s32.totalorder %s134, %s135
    %p144 = scmp.eq.s32.totalorder %s17, 0
    %p145 = por %p143, %p144
    %p146 = scmp.ne.s32.totalorder %s134, %s135
    %p147 = scmp.eq.s32.totalorder %s18, 3
    %p148 = por %p146, %p147
    %p150 = scmp.ne.s32.totalorder %s135, %s149
    %p151 = scmp.eq.s32.totalorder %s18, 0
    %p152 = por %p150, %p151
    %s154 = sadd.s32 %s153, 1
    %p157 = scmp.eq.s32.totalorder %s12, 3
    %p158 = scmp.ne.s32.totalorder %s153, %s155
    %p159 = scmp.eq.s32.totalorder %s12, 0
    %p160 = por %p158, %p159
    %p161 = scmp.ne.s32.totalorder %s153, %s155
    %p162 = scmp.eq.s32.totalorder %s17, 3
    %p163 = por %p161, %p162
    %p164 = scmp.ne.s32.totalorder %s155, %s156
    %p165 = scmp.eq.s32.totalorder %s17, 0
    %p166 = por %p164, %p165
    %p167 = scmp.ne.s32.totalorder %s155, %s156
    %p168 = scmp.eq.s32.totalorder %s18, 3
    %p169 = por %p167, %p168
    %p171 = scmp.ne.s32.totalorder %s156, %s170
    %p172 = scmp.eq.s32.totalorder %s18, 0
    %p173 = por %p171, %p172
    %s175 = sadd.s32 %s174, 1
    %p178 = scmp.eq.s32.totalorder %s12, 3
    %p179 = scmp.ne.s32.totalorder %s174, %s176
    %p180 = scmp.eq.s32.totalorder %s12, 0
    %p181 = por %p179, %p180
    %p182 = scmp.ne.s32.totalorder %s174, %s176
    %p183 = scmp.eq.s32.totalorder %s17, 3
    %p184 = por %p182, %p183
    %p185 = scmp.ne.s32.totalorder %s176, %s177
    %p186 = scmp.eq.s32.totalorder %s17, 0
    %p187 = por %p185, %p186
    %p188 = scmp.ne.s32.totalorder %s176, %s177
    %p189 = scmp.eq.s32.totalorder %s18, 3
    %p190 = por %p188, %p189
    %p192 = scmp.ne.s32.totalorder %s177, %s191
    %p193 = scmp.eq.s32.totalorder %s18, 0
    %p194 = por %p192, %p193
    %s195 = ssub.s32 %s19, %s31
    %s196 = ssub.s32 %s20, %s27
    %s197 = sor.u32 %s195, %s196
    %p198 = scmp.eq.s32.totalorder %s197, 0
    %s200 = sadd.s32 %s199, 1
    %s201 = scalar_select %p198, %s199, %s200
    %p204 = pneg %p198
    %p205 = scmp.eq.s32.totalorder %s12, 3
    %p206 = por %p204, %p205
    %p207 = scmp.ne.s32.totalorder %s199, %s202
    %p208 = scmp.eq.s32.totalorder %s12, 0
    %p209 = por %p207, %p208
    %p210 = scmp.ne.s32.totalorder %s199, %s202
    %p211 = scmp.eq.s32.totalorder %s17, 3
    %p212 = por %p210, %p211
    %p213 = scmp.ne.s32.totalorder %s202, %s203
    %p214 = scmp.eq.s32.totalorder %s17, 0
    %p215 = por %p213, %p214
    %p216 = scmp.ne.s32.totalorder %s202, %s203
    %p217 = scmp.eq.s32.totalorder %s18, 3
    %p218 = por %p216, %p217
    %p220 = scmp.ne.s32.totalorder %s203, %s219
    %p221 = scmp.eq.s32.totalorder %s18, 0
    %p222 = por %p220, %p221
    %p223 = scmp.le.s32.totalorder 1, %s12
    %p224 = scmp.lt.s32.totalorder %s12, 5
    %p225 = pnand %p223, %p224
    %p226 = pneg %p225
    // Predicated region
    $region9: #{resconv_forward.1} parent=5 // pred_check
      _
    $region10: #{resconv_forward.1} parent=5 // pred_check_branch
      %228 = sbr.rel (%p225) target = $region12
    $region11: #{resconv_forward.1} parent=5 // pred_region
      %s229 = ssub.s32 %s12, 1
      // Predicated region
      $region13: #{resconv_forward.1} parent=11 // pred_check
        %p230 = pneg %p145
      $region14: #{resconv_forward.1} parent=11 // pred_check_branch
        %232 = sbr.rel (%p230) target = $region16
      $region15: #{resconv_forward.1} parent=11 // pred_region
        _
      $region16: #{resconv_forward.1} parent=11 // pred_fallthru
        _
      // Predicated region
      $region17: #{resconv_forward.1} parent=11 // pred_check
        %p233 = pneg %p166
      $region18: #{resconv_forward.1} parent=11 // pred_check_branch
        %235 = sbr.rel (%p233) target = $region20
      $region19: #{resconv_forward.1} parent=11 // pred_region
        _
      $region20: #{resconv_forward.1} parent=11 // pred_fallthru
        _
      // Predicated region
      $region21: #{resconv_forward.1} parent=11 // pred_check
        %p236 = pneg %p187
      $region22: #{resconv_forward.1} parent=11 // pred_check_branch
        %238 = sbr.rel (%p236) target = $region24
      $region23: #{resconv_forward.1} parent=11 // pred_region
        _
      $region24: #{resconv_forward.1} parent=11 // pred_fallthru
        _
    $region12: #{resconv_forward.1} parent=5 // pred_fallthru
      _
    %p239 = scmp.lt.s32.totalorder %s12, 4
    // Predicated region
    $region25: #{resconv_forward.1} parent=5 // pred_check
      %p240 = pneg %p239
    $region26: #{resconv_forward.1} parent=5 // pred_check_branch
      %242 = sbr.rel (%p240) target = $region28
    $region27: #{resconv_forward.1} parent=5 // pred_region
      // Predicated region
      $region29: #{resconv_forward.1} parent=27 // pred_check
        %p243 = pneg %p54
      $region30: #{resconv_forward.1} parent=27 // pred_check_branch
        %245 = sbr.rel (%p243) target = $region32
      $region31: #{resconv_forward.1} parent=27 // pred_region
        %s246 = smul.u32 %s20, 8
        %s247 = ssub.s32 %s246, 1
        %p248 = scmp.gt.s32.totalorder %s247, 0
        %s249 = scalar_select %p248, %s247, 0
        %p250 = scmp.lt.s32.totalorder %s19, 1
        %s251 = scalar_select %p250, %s19, 1
        %p252 = scmp.lt.s32.totalorder %s249, 15
        %s253 = scalar_select %p252, %s249, 15
        %s254 = smul.addr %s253, 2
        %s255 = smul.addr %s251, 32
        %s256 = sadd.s32 %s254, %s255
        %s257 = smul.addr %s256, 4
        %s258 = scalar_lea.vmem %s0, %s257
        %s259 = smul.u32 %s20, 8
        %s260 = ssub.s32 %s259, 1
        %p261 = scmp.gt.s32.totalorder %s260, 0
        %s262 = scalar_select %p261, %s260, 0
      $region32: #{resconv_forward.1} parent=27 // pred_fallthru
        _
      // Predicated region
      $region33: #{resconv_forward.1} parent=27 // pred_check
        %p263 = pneg %p82
      $region34: #{resconv_forward.1} parent=27 // pred_check_branch
        %265 = sbr.rel (%p263) target = $region36
      $region35: #{resconv_forward.1} parent=27 // pred_region
        %s266 = smul.u32 8, %s20
        %p267 = scmp.lt.s32.totalorder %s19, 1
        %s268 = scalar_select %p267, %s19, 1
        %p269 = scmp.lt.s32.totalorder %s266, 15
        %s270 = scalar_select %p269, %s266, 15
        %s271 = smul.addr %s270, 2
        %s272 = smul.addr %s268, 32
        %s273 = sadd.s32 %s271, %s272
        %s274 = smul.addr %s273, 4
        %s275 = scalar_lea.vmem %s1, %s274
        %s276 = smul.u32 8, %s20
      $region36: #{resconv_forward.1} parent=27 // pred_fallthru
        _
      // Predicated region
      $region37: #{resconv_forward.1} parent=27 // pred_check
        %p277 = pneg %p118
      $region38: #{resconv_forward.1} parent=27 // pred_check_branch
        %279 = sbr.rel (%p277) target = $region40
      $region39: #{resconv_forward.1} parent=27 // pred_region
        %s280 = sadd.s32 %s20, 1
        %s281 = smul.u32 %s280, 8
        %p282 = scmp.lt.s32.totalorder %s281, 15
        %s283 = scalar_select %p282, %s281, 15
        %p284 = scmp.lt.s32.totalorder %s19, 1
        %s285 = scalar_select %p284, %s19, 1
        %p286 = scmp.lt.s32.totalorder %s283, 15
        %s287 = scalar_select %p286, %s283, 15
        %s288 = smul.addr %s287, 2
        %s289 = smul.addr %s285, 32
        %s290 = sadd.s32 %s288, %s289
        %s291 = smul.addr %s290, 4
        %s292 = scalar_lea.vmem %s2, %s291
        %s293 = sadd.s32 %s20, 1
        %s294 = smul.u32 %s293, 8
        %p295 = scmp.lt.s32.totalorder %s294, 15
        %s296 = scalar_select %p295, %s294, 15
      $region40: #{resconv_forward.1} parent=27 // pred_fallthru
        _
    $region28: #{resconv_forward.1} parent=5 // pred_fallthru
      _
    %p297 = scmp.le.s32.totalorder 1, %s12
    %p298 = scmp.lt.s32.totalorder %s12, 5
    %p299 = pnand %p297, %p298
    %p300 = pneg %p299
    // Predicated region
    $region41: #{resconv_forward.1} parent=5 // pred_check
      _
    $region42: #{resconv_forward.1} parent=5 // pred_check_branch
      %302 = sbr.rel (%p299) target = $region44
    $region43: #{resconv_forward.1} parent=5 // pred_region
      %s303 = ssub.s32 %s12, 1
      %s304 = smul.u32 %s22, 8
      %s305 = ssub.s32 %s304, 1
      %p306 = scmp.gt.s32.totalorder %s305, 0
      %s307 = scalar_select %p306, %s305, 0
      %p308 = scmp.lt.s32.totalorder %s21, 1
      %s309 = scalar_select %p308, %s21, 1
      %p310 = scmp.lt.s32.totalorder %s307, 15
      %s311 = scalar_select %p310, %s307, 15
      %s312 = smul.addr %s311, 2
      %s313 = smul.addr %s309, 32
      %s314 = sadd.s32 %s312, %s313
      %s315 = smul.addr %s314, 4
      %s316 = scalar_lea.vmem %s0, %s315
      %p317 = pneg %p60
      %p318 = pneg %p57
      %s319 = smul.u32 8, %s22
      %p320 = scmp.lt.s32.totalorder %s21, 1
      %s321 = scalar_select %p320, %s21, 1
      %p322 = scmp.lt.s32.totalorder %s319, 15
      %s323 = scalar_select %p322, %s319, 15
      %s324 = smul.addr %s323, 2
      %s325 = smul.addr %s321, 32
      %s326 = sadd.s32 %s324, %s325
      %s327 = smul.addr %s326, 4
      %s328 = scalar_lea.vmem %s1, %s327
      %p329 = pneg %p88
      %p330 = pneg %p85
      %s331 = sadd.s32 %s22, 1
      %s332 = smul.u32 %s331, 8
      %p333 = scmp.lt.s32.totalorder %s332, 15
      %s334 = scalar_select %p333, %s332, 15
      %p335 = scmp.lt.s32.totalorder %s21, 1
      %s336 = scalar_select %p335, %s21, 1
      %p337 = scmp.lt.s32.totalorder %s334, 15
      %s338 = scalar_select %p337, %s334, 15
      %s339 = smul.addr %s338, 2
      %s340 = smul.addr %s336, 32
      %s341 = sadd.s32 %s339, %s340
      %s342 = smul.addr %s341, 4
      %s343 = scalar_lea.vmem %s2, %s342
      %p344 = pneg %p124
      %p345 = pneg %p121
      %p346 = pneg %p145
      %p347 = pneg %p142
      %p348 = pneg %p166
      %p349 = pneg %p163
      %p350 = pneg %p187
      %p351 = pneg %p184
      %p352 = pneg %p215
      %p353 = pneg %p212
      %s354 = smul.u32 8, %s22
      %p355 = scmp.lt.s32.totalorder %s21, 1
      %s356 = scalar_select %p355, %s21, 1
      %p357 = scmp.lt.s32.totalorder %s354, 15
      %s358 = scalar_select %p357, %s354, 15
      %s359 = smul.addr %s358, 2
      %s360 = smul.addr %s356, 32
      %s361 = sadd.s32 %s359, %s360
      %s362 = smul.addr %s361, 8
      %s363 = scalar_lea.vmem %s6, %s362
      %s364 = smul.u32 %s22, 8
      %s365 = ssub.s32 %s364, 1
      %p366 = scmp.gt.s32.totalorder %s365, 0
      %s367 = scalar_select %p366, %s365, 0
      %p368 = scmp.lt.s32.totalorder %s21, 1
      %s369 = scalar_select %p368, %s21, 1
      %p370 = scmp.lt.s32.totalorder %s367, 15
      %s371 = scalar_select %p370, %s367, 15
      %s372 = smul.addr %s371, 2
      %s373 = smul.addr %s369, 32
      %s374 = sadd.s32 %s372, %s373
      %s375 = smul.addr %s374, 4
      %s376 = scalar_lea.vmem %s0, %s375
      %s377 = smul.u32 %s22, 8
      %s378 = ssub.s32 %s377, 1
      %p379 = scmp.gt.s32.totalorder %s378, 0
      %s380 = scalar_select %p379, %s378, 0
      %s381 = smul.u32 8, %s22
      %p382 = scmp.lt.s32.totalorder %s21, 1
      %s383 = scalar_select %p382, %s21, 1
      %p384 = scmp.lt.s32.totalorder %s381, 15
      %s385 = scalar_select %p384, %s381, 15
      %s386 = smul.addr %s385, 2
      %s387 = smul.addr %s383, 32
      %s388 = sadd.s32 %s386, %s387
      %s389 = smul.addr %s388, 4
      %s390 = scalar_lea.vmem %s1, %s389
      %s391 = smul.u32 8, %s22
      %s392 = sadd.s32 %s22, 1
      %s393 = smul.u32 %s392, 8
      %p394 = scmp.lt.s32.totalorder %s393, 15
      %s395 = scalar_select %p394, %s393, 15
      %p396 = scmp.lt.s32.totalorder %s21, 1
      %s397 = scalar_select %p396, %s21, 1
      %p398 = scmp.lt.s32.totalorder %s395, 15
      %s399 = scalar_select %p398, %s395, 15
      %s400 = smul.addr %s399, 2
      %s401 = smul.addr %s397, 32
      %s402 = sadd.s32 %s400, %s401
      %s403 = smul.addr %s402, 4
      %s404 = scalar_lea.vmem %s2, %s403
      %s405 = sadd.s32 %s22, 1
      %s406 = smul.u32 %s405, 8
      %p407 = scmp.lt.s32.totalorder %s406, 15
      %s408 = scalar_select %p407, %s406, 15
      %s409 = smul.u32 8, %s22
      %p410 = scmp.lt.s32.totalorder %s21, 1
      %s411 = scalar_select %p410, %s21, 1
      %p412 = scmp.lt.s32.totalorder %s409, 15
      %s413 = scalar_select %p412, %s409, 15
      %s414 = smul.addr %s413, 2
      %s415 = smul.addr %s411, 32
      %s416 = sadd.s32 %s414, %s415
      %s417 = smul.addr %s416, 8
      %s418 = scalar_lea.vmem %s6, %s417
      %s419 = smul.u32 8, %s22
      %v421 = vld [vmem:[%s376] sm:$0xf]
      %v422 = vld [vmem:[%s376 + $0x4] sm:$0xf]
      %v425 = vunpack.c.l.b16 %v421
      %v426 = vunpack.c.l.b16 %v422
      %v427 = vpack.c.b16 %v426, %v425
      %428 = vrot.lane.b32.xlu0 %v427, 4
      %v429 = vpop.permute.xlu0 %428
      %vm431 = vcmask 64544
      %432 = vst.msk [vmem:[#allocation2] sm:$0xff] %vm431, %v429
      %v434 = vshrl.u32 %v427, 16
      %v436 = vrot.slane %v434, 7
      %v437 = vshll.u32 %v427, 16
      %v439 = vor.u32 %v436, %v437
      %vm441 = vcmask 31744
      %vm442 = vsmask.f32 7938
      %vm443 = vmand %vm441, %vm442
      %v444 = vld [vmem:[#allocation2] sm:$0xff]
      %v445 = vsel %vm443, %v439, %v444
      %446 = vst [vmem:[#allocation2] sm:$0xff] %v445
      %vm447 = vcmask 24576
      %vm448 = vsmask.f32 256
      %vm449 = vmand %vm447, %vm448
      %v450 = vld [vmem:[#allocation2] sm:$0x1]
      %v451 = vsel %vm449, 0, %v450
      %452 = vst [vmem:[#allocation2] sm:$0x1] %v451
      %v453 = vrot.slane %v437, 1
      %v454 = vor.u32 %v434, %v453
      %455 = vrot.lane.b32.xlu0 %v454, 8
      %v456 = vpop.permute.xlu0 %455
      %vm458 = vcmask 97344
      %vm459 = vsmask.f32 7424
      %vm460 = vmand %vm458, %vm459
      %v461 = vld [vmem:[#allocation2] sm:$0xff]
      %v462 = vsel %vm460, %v456, %v461
      %463 = vst [vmem:[#allocation2] sm:$0xff] %v462
      %vm464 = vcmask 97351
      %vm465 = vsmask.f32 7966
      %vm466 = vmand %vm464, %vm465
      %v467 = vld [vmem:[#allocation2] sm:$0x80]
      %v468 = vsel %vm466, 0, %v467
      %469 = vst [vmem:[#allocation2] sm:$0x80] %v468
      %v470 = vld [vmem:[%s390] sm:$0xf]
      %v471 = vld [vmem:[%s390 + $0x4] sm:$0xf]
      %v472 = vld [vmem:[%s390 + $0x8] sm:$0xf]
      %v473 = vld [vmem:[%s390 + $0xc] sm:$0xf]
      %v474 = vld [vmem:[%s390 + $0x10] sm:$0xf]
      %v475 = vld [vmem:[%s390 + $0x14] sm:$0xf]
      %v476 = vld [vmem:[%s390 + $0x18] sm:$0xf]
      %v477 = vld [vmem:[%s390 + $0x1c] sm:$0xf]
      %v478 = vld [vmem:[%s390 + $0x20] sm:$0xf]
      %v479 = vld [vmem:[%s390 + $0x24] sm:$0xf]
      %v480 = vld [vmem:[%s390 + $0x28] sm:$0xf]
      %v481 = vld [vmem:[%s390 + $0x2c] sm:$0xf]
      %v482 = vld [vmem:[%s390 + $0x30] sm:$0xf]
      %v483 = vld [vmem:[%s390 + $0x34] sm:$0xf]
      %v484 = vld [vmem:[%s390 + $0x38] sm:$0xf]
      %v485 = vld [vmem:[%s390 + $0x3c] sm:$0xf]
      %v502 = vunpack.c.l.b16 %v470
      %v503 = vunpack.c.l.b16 %v471
      %v504 = vunpack.c.l.b16 %v472
      %v505 = vunpack.c.l.b16 %v473
      %v506 = vunpack.c.l.b16 %v474
      %v507 = vunpack.c.l.b16 %v475
      %v508 = vunpack.c.l.b16 %v476
      %v509 = vunpack.c.l.b16 %v477
      %v510 = vunpack.c.l.b16 %v478
      %v511 = vunpack.c.l.b16 %v479
      %v512 = vunpack.c.l.b16 %v480
      %v513 = vunpack.c.l.b16 %v481
      %v514 = vunpack.c.l.b16 %v482
      %v515 = vunpack.c.l.b16 %v483
      %v516 = vunpack.c.l.b16 %v484
      %v517 = vunpack.c.l.b16 %v485
      %v518 = vpack.c.b16 %v503, %v502
      %v519 = vpack.c.b16 %v505, %v504
      %v520 = vpack.c.b16 %v507, %v506
      %v521 = vpack.c.b16 %v509, %v508
      %v522 = vpack.c.b16 %v511, %v510
      %v523 = vpack.c.b16 %v513, %v512
      %v524 = vpack.c.b16 %v515, %v514
      %v525 = vpack.c.b16 %v517, %v516
      %526 = vrot.lane.b32.xlu0 %v518, 4
      %v527 = vpop.permute.xlu0 %526
      %528 = vrot.lane.b32.xlu0 %v519, 4
      %v529 = vpop.permute.xlu0 %528
      %530 = vrot.lane.b32.xlu0 %v520, 4
      %v531 = vpop.permute.xlu0 %530
      %532 = vrot.lane.b32.xlu0 %v521, 4
      %v533 = vpop.permute.xlu0 %532
      %534 = vrot.lane.b32.xlu0 %v522, 4
      %v535 = vpop.permute.xlu0 %534
      %536 = vrot.lane.b32.xlu0 %v523, 4
      %v537 = vpop.permute.xlu0 %536
      %538 = vrot.lane.b32.xlu0 %v524, 4
      %v539 = vpop.permute.xlu0 %538
      %540 = vrot.lane.b32.xlu0 %v525, 4
      %v541 = vpop.permute.xlu0 %540
      %s550 = scalar_lea.vmem [#allocation2], 8
      %551 = vst.msk [vmem:[%s550] sm:$0xff] %vm431, %v527
      %552 = vst.msk [vmem:[%s550 + $0x8] sm:$0xff] %vm431, %v529
      %553 = vst.msk [vmem:[%s550 + $0x10] sm:$0xff] %vm431, %v531
      %554 = vst.msk [vmem:[%s550 + $0x18] sm:$0xff] %vm431, %v533
      %555 = vst.msk [vmem:[%s550 + $0x20] sm:$0xff] %vm431, %v535
      %556 = vst.msk [vmem:[%s550 + $0x28] sm:$0xff] %vm431, %v537
      %557 = vst.msk [vmem:[%s550 + $0x30] sm:$0xff] %vm431, %v539
      %558 = vst.msk [vmem:[%s550 + $0x38] sm:$0xff] %vm431, %v541
      %v560 = vshrl.u32 %v518, 16
      %v562 = vrot.slane %v560, 7
      %v563 = vshll.u32 %v518, 16
      %v565 = vor.u32 %v562, %v563
      %v567 = vshrl.u32 %v519, 16
      %v569 = vrot.slane %v567, 7
      %v570 = vshll.u32 %v519, 16
      %v572 = vor.u32 %v569, %v570
      %v574 = vshrl.u32 %v520, 16
      %v576 = vrot.slane %v574, 7
      %v577 = vshll.u32 %v520, 16
      %v579 = vor.u32 %v576, %v577
      %v581 = vshrl.u32 %v521, 16
      %v583 = vrot.slane %v581, 7
      %v584 = vshll.u32 %v521, 16
      %v586 = vor.u32 %v583, %v584
      %v588 = vshrl.u32 %v522, 16
      %v590 = vrot.slane %v588, 7
      %v591 = vshll.u32 %v522, 16
      %v593 = vor.u32 %v590, %v591
      %v595 = vshrl.u32 %v523, 16
      %v597 = vrot.slane %v595, 7
      %v598 = vshll.u32 %v523, 16
      %v600 = vor.u32 %v597, %v598
      %v602 = vshrl.u32 %v524, 16
      %v604 = vrot.slane %v602, 7
      %v605 = vshll.u32 %v524, 16
      %v607 = vor.u32 %v604, %v605
      %v609 = vshrl.u32 %v525, 16
      %v611 = vrot.slane %v609, 7
      %v612 = vshll.u32 %v525, 16
      %v614 = vor.u32 %v611, %v612
      %v623 = vld [vmem:[%s550] sm:$0xff]
      %v624 = vsel %vm443, %v565, %v623
      %625 = vst [vmem:[%s550] sm:$0xff] %v624
      %v626 = vld [vmem:[%s550 + $0x8] sm:$0xff]
      %v627 = vsel %vm443, %v572, %v626
      %628 = vst [vmem:[%s550 + $0x8] sm:$0xff] %v627
      %v629 = vld [vmem:[%s550 + $0x10] sm:$0xff]
      %v630 = vsel %vm443, %v579, %v629
      %631 = vst [vmem:[%s550 + $0x10] sm:$0xff] %v630
      %v632 = vld [vmem:[%s550 + $0x18] sm:$0xff]
      %v633 = vsel %vm443, %v586, %v632
      %634 = vst [vmem:[%s550 + $0x18] sm:$0xff] %v633
      %v635 = vld [vmem:[%s550 + $0x20] sm:$0xff]
      %v636 = vsel %vm443, %v593, %v635
      %637 = vst [vmem:[%s550 + $0x20] sm:$0xff] %v636
      %v638 = vld [vmem:[%s550 + $0x28] sm:$0xff]
      %v639 = vsel %vm443, %v600, %v638
      %640 = vst [vmem:[%s550 + $0x28] sm:$0xff] %v639
      %v641 = vld [vmem:[%s550 + $0x30] sm:$0xff]
      %v642 = vsel %vm443, %v607, %v641
      %643 = vst [vmem:[%s550 + $0x30] sm:$0xff] %v642
      %v644 = vld [vmem:[%s550 + $0x38] sm:$0xff]
      %v645 = vsel %vm443, %v614, %v644
      %646 = vst [vmem:[%s550 + $0x38] sm:$0xff] %v645
      %v647 = vld [vmem:[%s550] sm:$0x1]
      %v648 = vsel %vm449, 0, %v647
      %649 = vst [vmem:[%s550] sm:$0x1] %v648
      %v650 = vld [vmem:[%s550 + $0x8] sm:$0x1]
      %v651 = vsel %vm449, 0, %v650
      %652 = vst [vmem:[%s550 + $0x8] sm:$0x1] %v651
      %v653 = vld [vmem:[%s550 + $0x10] sm:$0x1]
      %v654 = vsel %vm449, 0, %v653
      %655 = vst [vmem:[%s550 + $0x10] sm:$0x1] %v654
      %v656 = vld [vmem:[%s550 + $0x18] sm:$0x1]
      %v657 = vsel %vm449, 0, %v656
      %658 = vst [vmem:[%s550 + $0x18] sm:$0x1] %v657
      %v659 = vld [vmem:[%s550 + $0x20] sm:$0x1]
      %v660 = vsel %vm449, 0, %v659
      %661 = vst [vmem:[%s550 + $0x20] sm:$0x1] %v660
      %v662 = vld [vmem:[%s550 + $0x28] sm:$0x1]
      %v663 = vsel %vm449, 0, %v662
      %664 = vst [vmem:[%s550 + $0x28] sm:$0x1] %v663
      %v665 = vld [vmem:[%s550 + $0x30] sm:$0x1]
      %v666 = vsel %vm449, 0, %v665
      %667 = vst [vmem:[%s550 + $0x30] sm:$0x1] %v666
      %v668 = vld [vmem:[%s550 + $0x38] sm:$0x1]
      %v669 = vsel %vm449, 0, %v668
      %670 = vst [vmem:[%s550 + $0x38] sm:$0x1] %v669
      %v671 = vrot.slane %v563, 1
      %v672 = vor.u32 %v560, %v671
      %v673 = vrot.slane %v570, 1
      %v674 = vor.u32 %v567, %v673
      %v675 = vrot.slane %v577, 1
      %v676 = vor.u32 %v574, %v675
      %v677 = vrot.slane %v584, 1
      %v678 = vor.u32 %v581, %v677
      %v679 = vrot.slane %v591, 1
      %v680 = vor.u32 %v588, %v679
      %v681 = vrot.slane %v598, 1
      %v682 = vor.u32 %v595, %v681
      %v683 = vrot.slane %v605, 1
      %v684 = vor.u32 %v602, %v683
      %v685 = vrot.slane %v612, 1
      %v686 = vor.u32 %v609, %v685
      %687 = vrot.lane.b32.xlu0 %v672, 8
      %v688 = vpop.permute.xlu0 %687
      %689 = vrot.lane.b32.xlu0 %v674, 8
      %v690 = vpop.permute.xlu0 %689
      %691 = vrot.lane.b32.xlu0 %v676, 8
      %v692 = vpop.permute.xlu0 %691
      %693 = vrot.lane.b32.xlu0 %v678, 8
      %v694 = vpop.permute.xlu0 %693
      %695 = vrot.lane.b32.xlu0 %v680, 8
      %v696 = vpop.permute.xlu0 %695
      %697 = vrot.lane.b32.xlu0 %v682, 8
      %v698 = vpop.permute.xlu0 %697
      %699 = vrot.lane.b32.xlu0 %v684, 8
      %v700 = vpop.permute.xlu0 %699
      %701 = vrot.lane.b32.xlu0 %v686, 8
      %v702 = vpop.permute.xlu0 %701
      %v711 = vld [vmem:[%s550] sm:$0xff]
      %v712 = vsel %vm460, %v688, %v711
      %713 = vst [vmem:[%s550] sm:$0xff] %v712
      %v714 = vld [vmem:[%s550 + $0x8] sm:$0xff]
      %v715 = vsel %vm460, %v690, %v714
      %716 = vst [vmem:[%s550 + $0x8] sm:$0xff] %v715
      %v717 = vld [vmem:[%s550 + $0x10] sm:$0xff]
      %v718 = vsel %vm460, %v692, %v717
      %719 = vst [vmem:[%s550 + $0x10] sm:$0xff] %v718
      %v720 = vld [vmem:[%s550 + $0x18] sm:$0xff]
      %v721 = vsel %vm460, %v694, %v720
      %722 = vst [vmem:[%s550 + $0x18] sm:$0xff] %v721
      %v723 = vld [vmem:[%s550 + $0x20] sm:$0xff]
      %v724 = vsel %vm460, %v696, %v723
      %725 = vst [vmem:[%s550 + $0x20] sm:$0xff] %v724
      %v726 = vld [vmem:[%s550 + $0x28] sm:$0xff]
      %v727 = vsel %vm460, %v698, %v726
      %728 = vst [vmem:[%s550 + $0x28] sm:$0xff] %v727
      %v729 = vld [vmem:[%s550 + $0x30] sm:$0xff]
      %v730 = vsel %vm460, %v700, %v729
      %731 = vst [vmem:[%s550 + $0x30] sm:$0xff] %v730
      %v732 = vld [vmem:[%s550 + $0x38] sm:$0xff]
      %v733 = vsel %vm460, %v702, %v732
      %734 = vst [vmem:[%s550 + $0x38] sm:$0xff] %v733
      %v735 = vld [vmem:[%s550] sm:$0x80]
      %v736 = vsel %vm466, 0, %v735
      %737 = vst [vmem:[%s550] sm:$0x80] %v736
      %v738 = vld [vmem:[%s550 + $0x8] sm:$0x80]
      %v739 = vsel %vm466, 0, %v738
      %740 = vst [vmem:[%s550 + $0x8] sm:$0x80] %v739
      %v741 = vld [vmem:[%s550 + $0x10] sm:$0x80]
      %v742 = vsel %vm466, 0, %v741
      %743 = vst [vmem:[%s550 + $0x10] sm:$0x80] %v742
      %v744 = vld [vmem:[%s550 + $0x18] sm:$0x80]
      %v745 = vsel %vm466, 0, %v744
      %746 = vst [vmem:[%s550 + $0x18] sm:$0x80] %v745
      %v747 = vld [vmem:[%s550 + $0x20] sm:$0x80]
      %v748 = vsel %vm466, 0, %v747
      %749 = vst [vmem:[%s550 + $0x20] sm:$0x80] %v748
      %v750 = vld [vmem:[%s550 + $0x28] sm:$0x80]
      %v751 = vsel %vm466, 0, %v750
      %752 = vst [vmem:[%s550 + $0x28] sm:$0x80] %v751
      %v753 = vld [vmem:[%s550 + $0x30] sm:$0x80]
      %v754 = vsel %vm466, 0, %v753
      %755 = vst [vmem:[%s550 + $0x30] sm:$0x80] %v754
      %v756 = vld [vmem:[%s550 + $0x38] sm:$0x80]
      %v757 = vsel %vm466, 0, %v756
      %758 = vst [vmem:[%s550 + $0x38] sm:$0x80] %v757
      %v759 = vld [vmem:[%s404] sm:$0xf]
      %v760 = vld [vmem:[%s404 + $0x4] sm:$0xf]
      %v763 = vunpack.c.l.b16 %v759
      %v764 = vunpack.c.l.b16 %v760
      %v765 = vpack.c.b16 %v764, %v763
      %766 = vrot.lane.b32.xlu0 %v765, 4
      %v767 = vpop.permute.xlu0 %766
      %s769 = scalar_lea.vmem [#allocation2], 72
      %770 = vst.msk [vmem:[%s769] sm:$0xff] %vm431, %v767
      %v772 = vshrl.u32 %v765, 16
      %v774 = vrot.slane %v772, 7
      %v775 = vshll.u32 %v765, 16
      %v777 = vor.u32 %v774, %v775
      %v779 = vld [vmem:[%s769] sm:$0xff]
      %v780 = vsel %vm443, %v777, %v779
      %781 = vst [vmem:[%s769] sm:$0xff] %v780
      %v782 = vld [vmem:[%s769] sm:$0x1]
      %v783 = vsel %vm449, 0, %v782
      %784 = vst [vmem:[%s769] sm:$0x1] %v783
      %v785 = vrot.slane %v775, 1
      %v786 = vor.u32 %v772, %v785
      %787 = vrot.lane.b32.xlu0 %v786, 8
      %v788 = vpop.permute.xlu0 %787
      %v790 = vld [vmem:[%s769] sm:$0xff]
      %v791 = vsel %vm460, %v788, %v790
      %792 = vst [vmem:[%s769] sm:$0xff] %v791
      %v793 = vld [vmem:[%s769] sm:$0x80]
      %v794 = vsel %vm466, 0, %v793
      %795 = vst [vmem:[%s769] sm:$0x80] %v794
      %p796 = scmp.eq.s32.totalorder %s22, 0
      // Predicated region
      $region45: #{resconv_forward.1} parent=43 // pred_check
        %p797 = pneg %p796
      $region46: #{resconv_forward.1} parent=43 // pred_check_branch
        %799 = sbr.rel (%p797) target = $region48
      $region47: #{resconv_forward.1} parent=43 // pred_region
        %vm800 = vcmask 97280
        %801 = vst.msk [vmem:[#allocation2] sm:$0xff] %vm800, 0
      $region48: #{resconv_forward.1} parent=43 // pred_fallthru
        _
      %p802 = scmp.eq.s32.totalorder %s22, 1
      // Predicated region
      $region49: #{resconv_forward.1} parent=43 // pred_check
        %p803 = pneg %p802
      $region50: #{resconv_forward.1} parent=43 // pred_check_branch
        %805 = sbr.rel (%p803) target = $region52
      $region51: #{resconv_forward.1} parent=43 // pred_region
        %vm806 = vcmask 97280
        %807 = vst.msk [vmem:[%s769] sm:$0xff] %vm806, 0
      $region52: #{resconv_forward.1} parent=43 // pred_fallthru
        _
      %v808 = vld [vmem:[%s4] sm:$0x1]
      %v809 = vld [vmem:[%s5] sm:$0x1]
      %v810 = vld [vmem:[#allocation2] sm:$0xff]
      %v811 = vld [vmem:[#allocation2 + $0x8] sm:$0xff]
      %v812 = vld [vmem:[#allocation2 + $0x10] sm:$0xff]
      %v813 = vld [vmem:[#allocation2 + $0x18] sm:$0xff]
      %v814 = vld [vmem:[#allocation2 + $0x20] sm:$0xff]
      %v815 = vld [vmem:[#allocation2 + $0x28] sm:$0xff]
      %v816 = vld [vmem:[#allocation2 + $0x30] sm:$0xff]
      %v817 = vld [vmem:[#allocation2 + $0x38] sm:$0xff]
      %v818 = vld [vmem:[%s3] sm:$0xf]
      %v819 = vld [vmem:[%s3 + $0x4] sm:$0x3]
      %s820 = sadd.s32 0, 1
      %s821 = smul.addr %s820, 8
      %s822 = scalar_lea.vmem [#allocation2], %s821
      %v823 = vld [vmem:[%s822] sm:$0xff]
      %v824 = vld [vmem:[%s822 + $0x8] sm:$0xff]
      %v825 = vld [vmem:[%s822 + $0x10] sm:$0xff]
      %v826 = vld [vmem:[%s822 + $0x18] sm:$0xff]
      %v827 = vld [vmem:[%s822 + $0x20] sm:$0xff]
      %v828 = vld [vmem:[%s822 + $0x28] sm:$0xff]
      %v829 = vld [vmem:[%s822 + $0x30] sm:$0xff]
      %v830 = vld [vmem:[%s822 + $0x38] sm:$0xff]
      %s831 = scalar_lea.vmem %s3, 8
      %v832 = vld [vmem:[%s831] sm:$0xf]
      %v833 = vld [vmem:[%s831 + $0x4] sm:$0x3]
      %v836 = vunpack.c.l.b16 %v832
      %v837 = vunpack.c.l.b16 %v833
      %v838 = vpack.c.b16 %v837, %v836
      %vm839 = vcmask 97280
      %v841 = vsel %vm839, %v823, 0
      %v844 = vsel %vm839, %v824, 0
      %v847 = vsel %vm839, %v825, 0
      %v850 = vsel %vm839, %v826, 0
      %v853 = vsel %vm839, %v827, 0
      %v856 = vsel %vm839, %v828, 0
      %v859 = vsel %vm839, %v829, 0
      %v862 = vsel %vm839, %v830, 0
      %vm864 = vcmask 1045504
      %v866 = vsel %vm864, %v838, 0
      %868 = vmatprep.subr.bf16.mxu0 0
      %869 = vmatpush1.bf16.msra.mxu0 %v866
      %870 = vmatprep.subr.bf16.mxu0 0
      %871 = vmatpush1.bf16.msra.mxu0 0
      %872 = vmatprep.subr.bf16.mxu0 0
      %873 = vmatpush1.bf16.msra.mxu0 0
      %874 = vmatprep.subr.bf16.mxu0 0
      %875 = vmatpush1.bf16.msra.mxu0 0
      %876 = vmatprep.subr.bf16.mxu0 0
      %877 = vmatpush1.bf16.msra.mxu0 0
      %878 = vmatprep.subr.bf16.mxu0 0
      %879 = vmatpush1.bf16.msra.mxu0 0
      %880 = vmatprep.subr.bf16.mxu0 0
      %881 = vmatpush1.bf16.msra.mxu0 0
      %882 = vmatprep.subr.bf16.mxu0 0
      %883 = vmatpush1.bf16.msra.mxu0 0
      %884 = vmatprep.subr.bf16.mxu0 0
      %885 = vmatpush1.bf16.msra.mxu0 0
      %886 = vmatprep.subr.bf16.mxu0 0
      %887 = vmatpush1.bf16.msra.mxu0 0
      %888 = vmatprep.subr.bf16.mxu0 0
      %889 = vmatpush1.bf16.msra.mxu0 0
      %890 = vmatprep.subr.bf16.mxu0 0
      %891 = vmatpush1.bf16.msra.mxu0 0
      %892 = vmatprep.subr.bf16.mxu0 0
      %893 = vmatpush1.bf16.msra.mxu0 0
      %894 = vmatprep.subr.bf16.mxu0 0
      %895 = vmatpush1.bf16.msra.mxu0 0
      %896 = vmatprep.subr.bf16.mxu0 0
      %897 = vmatpush1.bf16.msra.mxu0 0
      %898 = vmatprep.subr.bf16.mxu0 0
      %899 = vmatpush1.bf16.msra.mxu0 0
      %900 = vmatprep.mubr.bf16.mxu0 0
      %901 = vmatmul.mubr.bf16.gmra.mrb[0].mxu0 %v841
      %v902 = vpop.f32.mrb[0].mxu0
      %v903 = vadd.f32 0.0, %v902
      %v904 = vpop.f32.mrb[0].mxu0
      %v905 = vpop.f32.mrb[0].mxu0
      %v906 = vadd.f32 0.0, %v905
      %v907 = vpop.f32.mrb[0].mxu0
      %908 = vmatprep.mubr.bf16.mxu0 0
      %909 = vmatmul.mubr.bf16.gmra.mrb[0].mxu0 %v844
      %v910 = vpop.f32.mrb[0].mxu0
      %v911 = vadd.f32 0.0, %v910
      %v912 = vpop.f32.mrb[0].mxu0
      %v913 = vpop.f32.mrb[0].mxu0
      %v914 = vadd.f32 0.0, %v913
      %v915 = vpop.f32.mrb[0].mxu0
      %916 = vmatprep.mubr.bf16.mxu0 0
      %917 = vmatmul.mubr.bf16.gmra.mrb[0].mxu0 %v847
      %v918 = vpop.f32.mrb[0].mxu0
      %v919 = vadd.f32 0.0, %v918
      %v920 = vpop.f32.mrb[0].mxu0
      %v921 = vpop.f32.mrb[0].mxu0
      %v922 = vadd.f32 0.0, %v921
      %v923 = vpop.f32.mrb[0].mxu0
      %924 = vmatprep.mubr.bf16.mxu0 0
      %925 = vmatmul.mubr.bf16.gmra.mrb[0].mxu0 %v850
      %v926 = vpop.f32.mrb[0].mxu0
      %v927 = vadd.f32 0.0, %v926
      %v928 = vpop.f32.mrb[0].mxu0
      %v929 = vpop.f32.mrb[0].mxu0
      %v930 = vadd.f32 0.0, %v929
      %v931 = vpop.f32.mrb[0].mxu0
      %932 = vmatprep.mubr.bf16.mxu0 0
      %933 = vmatmul.mubr.bf16.gmra.mrb[0].mxu0 %v853
      %v934 = vpop.f32.mrb[0].mxu0
      %v935 = vadd.f32 0.0, %v934
      %v936 = vpop.f32.mrb[0].mxu0
      %v937 = vpop.f32.mrb[0].mxu0
      %v938 = vadd.f32 0.0, %v937
      %v939 = vpop.f32.mrb[0].mxu0
      %940 = vmatprep.mubr.bf16.mxu0 0
      %941 = vmatmul.mubr.bf16.gmra.mrb[0].mxu0 %v856
      %v942 = vpop.f32.mrb[0].mxu0
      %v943 = vadd.f32 0.0, %v942
      %v944 = vpop.f32.mrb[0].mxu0
      %v945 = vpop.f32.mrb[0].mxu0
      %v946 = vadd.f32 0.0, %v945
      %v947 = vpop.f32.mrb[0].mxu0
      %948 = vmatprep.mubr.bf16.mxu0 0
      %949 = vmatmul.mubr.bf16.gmra.mrb[0].mxu0 %v859
      %v950 = vpop.f32.mrb[0].mxu0
      %v951 = vadd.f32 0.0, %v950
      %v952 = vpop.f32.mrb[0].mxu0
      %v953 = vpop.f32.mrb[0].mxu0
      %v954 = vadd.f32 0.0, %v953
      %v955 = vpop.f32.mrb[0].mxu0
      %956 = vmatprep.mubr.bf16.mxu0 0
      %957 = vmatmul.mubr.bf16.gmra.mrb[0].mxu0 %v862
      %v958 = vpop.f32.mrb[0].mxu0
      %v959 = vadd.f32 0.0, %v958
      %v960 = vpop.f32.mrb[0].mxu0
      %v961 = vpop.f32.mrb[0].mxu0
      %v962 = vadd.f32 0.0, %v961
      %v963 = vpop.f32.mrb[0].mxu0
      %964 = vdwg.mxu0
      %v967 = vunpack.c.l.b16 %v818
      %v968 = vunpack.c.l.b16 %v819
      %v969 = vpack.c.b16 %v968, %v967
      %v971 = vsel %vm839, %v810, 0
      %v974 = vsel %vm839, %v811, 0
      %v977 = vsel %vm839, %v812, 0
      %v980 = vsel %vm839, %v813, 0
      %v983 = vsel %vm839, %v814, 0
      %v986 = vsel %vm839, %v815, 0
      %v989 = vsel %vm839, %v816, 0
      %v992 = vsel %vm839, %v817, 0
      %v995 = vsel %vm864, %v969, 0
      %997 = vmatprep.subr.bf16.mxu0 0
      %998 = vmatpush1.bf16.msra.mxu0 %v995
      %999 = vmatprep.subr.bf16.mxu0 0
      %1000 = vmatpush1.bf16.msra.mxu0 0
      %1001 = vmatprep.subr.bf16.mxu0 0
      %1002 = vmatpush1.bf16.msra.mxu0 0
      %1003 = vmatprep.subr.bf16.mxu0 0
      %1004 = vmatpush1.bf16.msra.mxu0 0
      %1005 = vmatprep.subr.bf16.mxu0 0
      %1006 = vmatpush1.bf16.msra.mxu0 0
      %1007 = vmatprep.subr.bf16.mxu0 0
      %1008 = vmatpush1.bf16.msra.mxu0 0
      %1009 = vmatprep.subr.bf16.mxu0 0
      %1010 = vmatpush1.bf16.msra.mxu0 0
      %1011 = vmatprep.subr.bf16.mxu0 0
      %1012 = vmatpush1.bf16.msra.mxu0 0
      %1013 = vmatprep.subr.bf16.mxu0 0
      %1014 = vmatpush1.bf16.msra.mxu0 0
      %1015 = vmatprep.subr.bf16.mxu0 0
      %1016 = vmatpush1.bf16.msra.mxu0 0
      %1017 = vmatprep.subr.bf16.mxu0 0
      %1018 = vmatpush1.bf16.msra.mxu0 0
      %1019 = vmatprep.subr.bf16.mxu0 0
      %1020 = vmatpush1.bf16.msra.mxu0 0
      %1021 = vmatprep.subr.bf16.mxu0 0
      %1022 = vmatpush1.bf16.msra.mxu0 0
      %1023 = vmatprep.subr.bf16.mxu0 0
      %1024 = vmatpush1.bf16.msra.mxu0 0
      %1025 = vmatprep.subr.bf16.mxu0 0
      %1026 = vmatpush1.bf16.msra.mxu0 0
      %1027 = vmatprep.subr.bf16.mxu0 0
      %1028 = vmatpush1.bf16.msra.mxu0 0
      %1029 = vmatprep.mubr.bf16.mxu0 0
      %1030 = vmatmul.mubr.bf16.gmra.mrb[0].mxu0 %v971
      %v1031 = vpop.f32.mrb[0].mxu0
      %v1032 = vadd.f32 %v903, %v1031
      %v1033 = vpop.f32.mrb[0].mxu0
      %v1034 = vpop.f32.mrb[0].mxu0
      %v1035 = vadd.f32 %v906, %v1034
      %v1036 = vpop.f32.mrb[0].mxu0
      %1037 = vmatprep.mubr.bf16.mxu0 0
      %1038 = vmatmul.mubr.bf16.gmra.mrb[0].mxu0 %v974
      %v1039 = vpop.f32.mrb[0].mxu0
      %v1040 = vadd.f32 %v911, %v1039
      %v1041 = vpop.f32.mrb[0].mxu0
      %v1042 = vpop.f32.mrb[0].mxu0
      %v1043 = vadd.f32 %v914, %v1042
      %v1044 = vpop.f32.mrb[0].mxu0
      %1045 = vmatprep.mubr.bf16.mxu0 0
      %1046 = vmatmul.mubr.bf16.gmra.mrb[0].mxu0 %v977
      %v1047 = vpop.f32.mrb[0].mxu0
      %v1048 = vadd.f32 %v919, %v1047
      %v1049 = vpop.f32.mrb[0].mxu0
      %v1050 = vpop.f32.mrb[0].mxu0
      %v1051 = vadd.f32 %v922, %v1050
      %v1052 = vpop.f32.mrb[0].mxu0
      %1053 = vmatprep.mubr.bf16.mxu0 0
      %1054 = vmatmul.mubr.bf16.gmra.mrb[0].mxu0 %v980
      %v1055 = vpop.f32.mrb[0].mxu0
      %v1056 = vadd.f32 %v927, %v1055
      %v1057 = vpop.f32.mrb[0].mxu0
      %v1058 = vpop.f32.mrb[0].mxu0
      %v1059 = vadd.f32 %v930, %v1058
      %v1060 = vpop.f32.mrb[0].mxu0
      %1061 = vmatprep.mubr.bf16.mxu0 0
      %1062 = vmatmul.mubr.bf16.gmra.mrb[0].mxu0 %v983
      %v1063 = vpop.f32.mrb[0].mxu0
      %v1064 = vadd.f32 %v935, %v1063
      %v1065 = vpop.f32.mrb[0].mxu0
      %v1066 = vpop.f32.mrb[0].mxu0
      %v1067 = vadd.f32 %v938, %v1066
      %v1068 = vpop.f32.mrb[0].mxu0
      %1069 = vmatprep.mubr.bf16.mxu0 0
      %1070 = vmatmul.mubr.bf16.gmra.mrb[0].mxu0 %v986
      %v1071 = vpop.f32.mrb[0].mxu0
      %v1072 = vadd.f32 %v943, %v1071
      %v1073 = vpop.f32.mrb[0].mxu0
      %v1074 = vpop.f32.mrb[0].mxu0
      %v1075 = vadd.f32 %v946, %v1074
      %v1076 = vpop.f32.mrb[0].mxu0
      %1077 = vmatprep.mubr.bf16.mxu0 0
      %1078 = vmatmul.mubr.bf16.gmra.mrb[0].mxu0 %v989
      %v1079 = vpop.f32.mrb[0].mxu0
      %v1080 = vadd.f32 %v951, %v1079
      %v1081 = vpop.f32.mrb[0].mxu0
      %v1082 = vpop.f32.mrb[0].mxu0
      %v1083 = vadd.f32 %v954, %v1082
      %v1084 = vpop.f32.mrb[0].mxu0
      %1085 = vmatprep.mubr.bf16.mxu0 0
      %1086 = vmatmul.mubr.bf16.gmra.mrb[0].mxu0 %v992
      %v1087 = vpop.f32.mrb[0].mxu0
      %v1088 = vadd.f32 %v959, %v1087
      %v1089 = vpop.f32.mrb[0].mxu0
      %v1090 = vpop.f32.mrb[0].mxu0
      %v1091 = vadd.f32 %v962, %v1090
      %v1092 = vpop.f32.mrb[0].mxu0
      %1093 = vdwg.mxu0
      %s1094 = sadd.s32 0, 2
      %s1095 = smul.addr %s1094, 8
      %s1096 = scalar_lea.vmem [#allocation2], %s1095
      %v1097 = vld [vmem:[%s1096] sm:$0xff]
      %v1098 = vld [vmem:[%s1096 + $0x8] sm:$0xff]
      %v1099 = vld [vmem:[%s1096 + $0x10] sm:$0xff]
      %v1100 = vld [vmem:[%s1096 + $0x18] sm:$0xff]
      %v1101 = vld [vmem:[%s1096 + $0x20] sm:$0xff]
      %v1102 = vld [vmem:[%s1096 + $0x28] sm:$0xff]
      %v1103 = vld [vmem:[%s1096 + $0x30] sm:$0xff]
      %v1104 = vld [vmem:[%s1096 + $0x38] sm:$0xff]
      %s1105 = scalar_lea.vmem %s3, 16
      %v1106 = vld [vmem:[%s1105] sm:$0xf]
      %v1107 = vld [vmem:[%s1105 + $0x4] sm:$0x3]
      %v1110 = vunpack.c.l.b16 %v1106
      %v1111 = vunpack.c.l.b16 %v1107
      %v1112 = vpack.c.b16 %v1111, %v1110
      %v1114 = vsel %vm839, %v1097, 0
      %v1117 = vsel %vm839, %v1098, 0
      %v1120 = vsel %vm839, %v1099, 0
      %v1123 = vsel %vm839, %v1100, 0
      %v1126 = vsel %vm839, %v1101, 0
      %v1129 = vsel %vm839, %v1102, 0
      %v1132 = vsel %vm839, %v1103, 0
      %v1135 = vsel %vm839, %v1104, 0
      %v1138 = vsel %vm864, %v1112, 0
      %1140 = vmatprep.subr.bf16.mxu0 0
      %1141 = vmatpush1.bf16.msra.mxu0 %v1138
      %1142 = vmatprep.subr.bf16.mxu0 0
      %1143 = vmatpush1.bf16.msra.mxu0 0
      %1144 = vmatprep.subr.bf16.mxu0 0
      %1145 = vmatpush1.bf16.msra.mxu0 0
      %1146 = vmatprep.subr.bf16.mxu0 0
      %1147 = vmatpush1.bf16.msra.mxu0 0
      %1148 = vmatprep.subr.bf16.mxu0 0
      %1149 = vmatpush1.bf16.msra.mxu0 0
      %1150 = vmatprep.subr.bf16.mxu0 0
      %1151 = vmatpush1.bf16.msra.mxu0 0
      %1152 = vmatprep.subr.bf16.mxu0 0
      %1153 = vmatpush1.bf16.msra.mxu0 0
      %1154 = vmatprep.subr.bf16.mxu0 0
      %1155 = vmatpush1.bf16.msra.mxu0 0
      %1156 = vmatprep.subr.bf16.mxu0 0
      %1157 = vmatpush1.bf16.msra.mxu0 0
      %1158 = vmatprep.subr.bf16.mxu0 0
      %1159 = vmatpush1.bf16.msra.mxu0 0
      %1160 = vmatprep.subr.bf16.mxu0 0
      %1161 = vmatpush1.bf16.msra.mxu0 0
      %1162 = vmatprep.subr.bf16.mxu0 0
      %1163 = vmatpush1.bf16.msra.mxu0 0
      %1164 = vmatprep.subr.bf16.mxu0 0
      %1165 = vmatpush1.bf16.msra.mxu0 0
      %1166 = vmatprep.subr.bf16.mxu0 0
      %1167 = vmatpush1.bf16.msra.mxu0 0
      %1168 = vmatprep.subr.bf16.mxu0 0
      %1169 = vmatpush1.bf16.msra.mxu0 0
      %1170 = vmatprep.subr.bf16.mxu0 0
      %1171 = vmatpush1.bf16.msra.mxu0 0
      %1172 = vmatprep.mubr.bf16.mxu0 0
      %1173 = vmatmul.mubr.bf16.gmra.mrb[0].mxu0 %v1114
      %v1174 = vpop.f32.mrb[0].mxu0
      %v1175 = vadd.f32 0.0, %v1174
      %v1176 = vpop.f32.mrb[0].mxu0
      %v1177 = vpop.f32.mrb[0].mxu0
      %v1178 = vadd.f32 0.0, %v1177
      %v1179 = vpop.f32.mrb[0].mxu0
      %1180 = vmatprep.mubr.bf16.mxu0 0
      %1181 = vmatmul.mubr.bf16.gmra.mrb[0].mxu0 %v1117
      %v1182 = vpop.f32.mrb[0].mxu0
      %v1183 = vadd.f32 0.0, %v1182
      %v1184 = vpop.f32.mrb[0].mxu0
      %v1185 = vpop.f32.mrb[0].mxu0
      %v1186 = vadd.f32 0.0, %v1185
      %v1187 = vpop.f32.mrb[0].mxu0
      %1188 = vmatprep.mubr.bf16.mxu0 0
      %1189 = vmatmul.mubr.bf16.gmra.mrb[0].mxu0 %v1120
      %v1190 = vpop.f32.mrb[0].mxu0
      %v1191 = vadd.f32 0.0, %v1190
      %v1192 = vpop.f32.mrb[0].mxu0
      %v1193 = vpop.f32.mrb[0].mxu0
      %v1194 = vadd.f32 0.0, %v1193
      %v1195 = vpop.f32.mrb[0].mxu0
      %1196 = vmatprep.mubr.bf16.mxu0 0
      %1197 = vmatmul.mubr.bf16.gmra.mrb[0].mxu0 %v1123
      %v1198 = vpop.f32.mrb[0].mxu0
      %v1199 = vadd.f32 0.0, %v1198
      %v1200 = vpop.f32.mrb[0].mxu0
      %v1201 = vpop.f32.mrb[0].mxu0
      %v1202 = vadd.f32 0.0, %v1201
      %v1203 = vpop.f32.mrb[0].mxu0
      %1204 = vmatprep.mubr.bf16.mxu0 0
      %1205 = vmatmul.mubr.bf16.gmra.mrb[0].mxu0 %v1126
      %v1206 = vpop.f32.mrb[0].mxu0
      %v1207 = vadd.f32 0.0, %v1206
      %v1208 = vpop.f32.mrb[0].mxu0
      %v1209 = vpop.f32.mrb[0].mxu0
      %v1210 = vadd.f32 0.0, %v1209
      %v1211 = vpop.f32.mrb[0].mxu0
      %1212 = vmatprep.mubr.bf16.mxu0 0
      %1213 = vmatmul.mubr.bf16.gmra.mrb[0].mxu0 %v1129
      %v1214 = vpop.f32.mrb[0].mxu0
      %v1215 = vadd.f32 0.0, %v1214
      %v1216 = vpop.f32.mrb[0].mxu0
      %v1217 = vpop.f32.mrb[0].mxu0
      %v1218 = vadd.f32 0.0, %v1217
      %v1219 = vpop.f32.mrb[0].mxu0
      %1220 = vmatprep.mubr.bf16.mxu0 0
      %1221 = vmatmul.mubr.bf16.gmra.mrb[0].mxu0 %v1132
      %v1222 = vpop.f32.mrb[0].mxu0
      %v1223 = vadd.f32 0.0, %v1222
      %v1224 = vpop.f32.mrb[0].mxu0
      %v1225 = vpop.f32.mrb[0].mxu0
      %v1226 = vadd.f32 0.0, %v1225
      %v1227 = vpop.f32.mrb[0].mxu0
      %1228 = vmatprep.mubr.bf16.mxu0 0
      %1229 = vmatmul.mubr.bf16.gmra.mrb[0].mxu0 %v1135
      %v1230 = vpop.f32.mrb[0].mxu0
      %v1231 = vadd.f32 0.0, %v1230
      %v1232 = vpop.f32.mrb[0].mxu0
      %v1233 = vpop.f32.mrb[0].mxu0
      %v1234 = vadd.f32 0.0, %v1233
      %v1235 = vpop.f32.mrb[0].mxu0
      %1236 = vdwg.mxu0
      %v1237 = vadd.f32 %v1032, %v1175
      %v1238 = vadd.f32 %v1035, %v1178
      %v1239 = vadd.f32 %v1040, %v1183
      %v1240 = vadd.f32 %v1043, %v1186
      %v1241 = vadd.f32 %v1048, %v1191
      %v1242 = vadd.f32 %v1051, %v1194
      %v1243 = vadd.f32 %v1056, %v1199
      %v1244 = vadd.f32 %v1059, %v1202
      %v1245 = vadd.f32 %v1064, %v1207
      %v1246 = vadd.f32 %v1067, %v1210
      %v1247 = vadd.f32 %v1072, %v1215
      %v1248 = vadd.f32 %v1075, %v1218
      %v1249 = vadd.f32 %v1080, %v1223
      %v1250 = vadd.f32 %v1083, %v1226
      %v1251 = vadd.f32 %v1088, %v1231
      %v1252 = vadd.f32 %v1091, %v1234
      %s1253 = smul.u32 0, 2
      %s1254 = smul.addr %s1253, 4
      %s1255 = scalar_lea.vmem %s390, %s1254
      %v1256 = vld [vmem:[%s1255] sm:$0xf]
      %v1257 = vld [vmem:[%s1255 + $0x4] sm:$0xf]
      %v1258 = vld [vmem:[%s1255 + $0x8] sm:$0xf]
      %v1259 = vld [vmem:[%s1255 + $0xc] sm:$0xf]
      %v1260 = vld [vmem:[%s1255 + $0x10] sm:$0xf]
      %v1261 = vld [vmem:[%s1255 + $0x14] sm:$0xf]
      %v1262 = vld [vmem:[%s1255 + $0x18] sm:$0xf]
      %v1263 = vld [vmem:[%s1255 + $0x1c] sm:$0xf]
      %v1264 = vld [vmem:[%s1255 + $0x20] sm:$0xf]
      %v1265 = vld [vmem:[%s1255 + $0x24] sm:$0xf]
      %v1266 = vld [vmem:[%s1255 + $0x28] sm:$0xf]
      %v1267 = vld [vmem:[%s1255 + $0x2c] sm:$0xf]
      %v1268 = vld [vmem:[%s1255 + $0x30] sm:$0xf]
      %v1269 = vld [vmem:[%s1255 + $0x34] sm:$0xf]
      %v1270 = vld [vmem:[%s1255 + $0x38] sm:$0xf]
      %v1271 = vld [vmem:[%s1255 + $0x3c] sm:$0xf]
      %v1272 = vunpack.c.l.bf16 %v1256
      %v1273 = vunpack.c.l.bf16 %v1257
      %v1274 = vunpack.c.l.bf16 %v1258
      %v1275 = vunpack.c.l.bf16 %v1259
      %v1276 = vunpack.c.l.bf16 %v1260
      %v1277 = vunpack.c.l.bf16 %v1261
      %v1278 = vunpack.c.l.bf16 %v1262
      %v1279 = vunpack.c.l.bf16 %v1263
      %v1280 = vunpack.c.l.bf16 %v1264
      %v1281 = vunpack.c.l.bf16 %v1265
      %v1282 = vunpack.c.l.bf16 %v1266
      %v1283 = vunpack.c.l.bf16 %v1267
      %v1284 = vunpack.c.l.bf16 %v1268
      %v1285 = vunpack.c.l.bf16 %v1269
      %v1286 = vunpack.c.l.bf16 %v1270
      %v1287 = vunpack.c.l.bf16 %v1271
      %v1289 = vlaneseq
      %v1290 = vshrl.u32 %v1289, 7
      %v1291 = vsub.s32 0, %v1290
      %v1292 = vrot.slane %v808, %v1291
      %v1294 = vmul.f32 %v1237, %v1292
      %v1295 = vmul.f32 %v1238, %v1292
      %v1296 = vmul.f32 %v1239, %v1292
      %v1297 = vmul.f32 %v1240, %v1292
      %v1298 = vmul.f32 %v1241, %v1292
      %v1299 = vmul.f32 %v1242, %v1292
      %v1300 = vmul.f32 %v1243, %v1292
      %v1301 = vmul.f32 %v1244, %v1292
      %v1302 = vmul.f32 %v1245, %v1292
      %v1303 = vmul.f32 %v1246, %v1292
      %v1304 = vmul.f32 %v1247, %v1292
      %v1305 = vmul.f32 %v1248, %v1292
      %v1306 = vmul.f32 %v1249, %v1292
      %v1307 = vmul.f32 %v1250, %v1292
      %v1308 = vmul.f32 %v1251, %v1292
      %v1309 = vmul.f32 %v1252, %v1292
      %v1311 = vlaneseq
      %v1312 = vshrl.u32 %v1311, 7
      %v1313 = vsub.s32 0, %v1312
      %v1314 = vrot.slane %v809, %v1313
      %v1316 = vadd.f32 %v1294, %v1314
      %v1317 = vadd.f32 %v1295, %v1314
      %v1318 = vadd.f32 %v1296, %v1314
      %v1319 = vadd.f32 %v1297, %v1314
      %v1320 = vadd.f32 %v1298, %v1314
      %v1321 = vadd.f32 %v1299, %v1314
      %v1322 = vadd.f32 %v1300, %v1314
      %v1323 = vadd.f32 %v1301, %v1314
      %v1324 = vadd.f32 %v1302, %v1314
      %v1325 = vadd.f32 %v1303, %v1314
      %v1326 = vadd.f32 %v1304, %v1314
      %v1327 = vadd.f32 %v1305, %v1314
      %v1328 = vadd.f32 %v1306, %v1314
      %v1329 = vadd.f32 %v1307, %v1314
      %v1330 = vadd.f32 %v1308, %v1314
      %v1331 = vadd.f32 %v1309, %v1314
      %v1332 = vadd.f32 %v1316, %v1272
      %v1333 = vadd.f32 %v1317, %v1273
      %v1334 = vadd.f32 %v1318, %v1274
      %v1335 = vadd.f32 %v1319, %v1275
      %v1336 = vadd.f32 %v1320, %v1276
      %v1337 = vadd.f32 %v1321, %v1277
      %v1338 = vadd.f32 %v1322, %v1278
      %v1339 = vadd.f32 %v1323, %v1279
      %v1340 = vadd.f32 %v1324, %v1280
      %v1341 = vadd.f32 %v1325, %v1281
      %v1342 = vadd.f32 %v1326, %v1282
      %v1343 = vadd.f32 %v1327, %v1283
      %v1344 = vadd.f32 %v1328, %v1284
      %v1345 = vadd.f32 %v1329, %v1285
      %v1346 = vadd.f32 %v1330, %v1286
      %v1347 = vadd.f32 %v1331, %v1287
      %vm1348 = vcmp.gt.f32.partialorder %v1332, 0.0
      %vm1349 = vcmp.gt.f32.partialorder %v1333, 0.0
      %vm1350 = vcmp.gt.f32.partialorder %v1334, 0.0
      %vm1351 = vcmp.gt.f32.partialorder %v1335, 0.0
      %vm1352 = vcmp.gt.f32.partialorder %v1336, 0.0
      %vm1353 = vcmp.gt.f32.partialorder %v1337, 0.0
      %vm1354 = vcmp.gt.f32.partialorder %v1338, 0.0
      %vm1355 = vcmp.gt.f32.partialorder %v1339, 0.0
      %vm1356 = vcmp.gt.f32.partialorder %v1340, 0.0
      %vm1357 = vcmp.gt.f32.partialorder %v1341, 0.0
      %vm1358 = vcmp.gt.f32.partialorder %v1342, 0.0
      %vm1359 = vcmp.gt.f32.partialorder %v1343, 0.0
      %vm1360 = vcmp.gt.f32.partialorder %v1344, 0.0
      %vm1361 = vcmp.gt.f32.partialorder %v1345, 0.0
      %vm1362 = vcmp.gt.f32.partialorder %v1346, 0.0
      %vm1363 = vcmp.gt.f32.partialorder %v1347, 0.0
      %v1364 = vmul.f32 %v1332, 0.2
      %v1365 = vmul.f32 %v1333, 0.2
      %v1366 = vmul.f32 %v1334, 0.2
      %v1367 = vmul.f32 %v1335, 0.2
      %v1368 = vmul.f32 %v1336, 0.2
      %v1369 = vmul.f32 %v1337, 0.2
      %v1370 = vmul.f32 %v1338, 0.2
      %v1371 = vmul.f32 %v1339, 0.2
      %v1372 = vmul.f32 %v1340, 0.2
      %v1373 = vmul.f32 %v1341, 0.2
      %v1374 = vmul.f32 %v1342, 0.2
      %v1375 = vmul.f32 %v1343, 0.2
      %v1376 = vmul.f32 %v1344, 0.2
      %v1377 = vmul.f32 %v1345, 0.2
      %v1378 = vmul.f32 %v1346, 0.2
      %v1379 = vmul.f32 %v1347, 0.2
      %v1380 = vsel %vm1348, %v1332, %v1364
      %v1381 = vsel %vm1349, %v1333, %v1365
      %v1382 = vsel %vm1350, %v1334, %v1366
      %v1383 = vsel %vm1351, %v1335, %v1367
      %v1384 = vsel %vm1352, %v1336, %v1368
      %v1385 = vsel %vm1353, %v1337, %v1369
      %v1386 = vsel %vm1354, %v1338, %v1370
      %v1387 = vsel %vm1355, %v1339, %v1371
      %v1388 = vsel %vm1356, %v1340, %v1372
      %v1389 = vsel %vm1357, %v1341, %v1373
      %v1390 = vsel %vm1358, %v1342, %v1374
      %v1391 = vsel %vm1359, %v1343, %v1375
      %v1392 = vsel %vm1360, %v1344, %v1376
      %v1393 = vsel %vm1361, %v1345, %v1377
      %v1394 = vsel %vm1362, %v1346, %v1378
      %v1395 = vsel %vm1363, %v1347, %v1379
      %s1396 = smul.u32 0, 16
      %s1397 = scalar_lea.vmem %s418, %s1396
      %vm1398 = vcmask 31744
      %1399 = vst.msk [vmem:[%s1397] sm:$0xff] %vm1398, %v1380
      %1400 = vst.msk [vmem:[%s1397 + $0x8] sm:$0xff] %vm1398, %v1381
      %1401 = vst.msk [vmem:[%s1397 + $0x10] sm:$0xff] %vm1398, %v1382
      %1402 = vst.msk [vmem:[%s1397 + $0x18] sm:$0xff] %vm1398, %v1383
      %1403 = vst.msk [vmem:[%s1397 + $0x20] sm:$0xff] %vm1398, %v1384
      %1404 = vst.msk [vmem:[%s1397 + $0x28] sm:$0xff] %vm1398, %v1385
      %1405 = vst.msk [vmem:[%s1397 + $0x30] sm:$0xff] %vm1398, %v1386
      %1406 = vst.msk [vmem:[%s1397 + $0x38] sm:$0xff] %vm1398, %v1387
      %1407 = vst.msk [vmem:[%s1397 + $0x40] sm:$0xff] %vm1398, %v1388
      %1408 = vst.msk [vmem:[%s1397 + $0x48] sm:$0xff] %vm1398, %v1389
      %1409 = vst.msk [vmem:[%s1397 + $0x50] sm:$0xff] %vm1398, %v1390
      %1410 = vst.msk [vmem:[%s1397 + $0x58] sm:$0xff] %vm1398, %v1391
      %1411 = vst.msk [vmem:[%s1397 + $0x60] sm:$0xff] %vm1398, %v1392
      %1412 = vst.msk [vmem:[%s1397 + $0x68] sm:$0xff] %vm1398, %v1393
      %1413 = vst.msk [vmem:[%s1397 + $0x70] sm:$0xff] %vm1398, %v1394
      %1414 = vst.msk [vmem:[%s1397 + $0x78] sm:$0xff] %vm1398, %v1395
      %s1415 = smul.u32 8, %s22
      %p1416 = scmp.lt.s32.totalorder %s21, 1
      %s1417 = scalar_select %p1416, %s21, 1
      %p1418 = scmp.lt.s32.totalorder %s1415, 15
      %s1419 = scalar_select %p1418, %s1415, 15
      %s1420 = smul.addr %s1419, 2
      %s1421 = smul.addr %s1417, 32
      %s1422 = sadd.s32 %s1420, %s1421
      %s1423 = smul.addr %s1422, 8
      %s1424 = scalar_lea.vmem %s6, %s1423
      // Predicated region
      $region53: #{resconv_forward.1} parent=43 // pred_check
        %p1425 = pneg %p212
      $region54: #{resconv_forward.1} parent=43 // pred_check_branch
        %1427 = sbr.rel (%p1425) target = $region56
      $region55: #{resconv_forward.1} parent=43 // pred_region
        %s1428 = smul.u32 8, %s22
      $region56: #{resconv_forward.1} parent=43 // pred_fallthru
        _
    $region44: #{resconv_forward.1} parent=5 // pred_fallthru
      _
    %p1429 = scmp.le.s32.totalorder 2, %s12
    // Predicated region
    $region57: #{resconv_forward.1} parent=5 // pred_check
      %p1430 = pneg %p1429
    $region58: #{resconv_forward.1} parent=5 // pred_check_branch
      %1432 = sbr.rel (%p1430) target = $region60
    $region59: #{resconv_forward.1} parent=5 // pred_region
      %s1433 = ssub.s32 %s12, 2
      // Predicated region
      $region61: #{resconv_forward.1} parent=59 // pred_check
        %p1434 = pneg %p218
      $region62: #{resconv_forward.1} parent=59 // pred_check_branch
        %1436 = sbr.rel (%p1434) target = $region64
      $region63: #{resconv_forward.1} parent=59 // pred_region
        %s1437 = smul.u32 8, %s24
        %p1438 = scmp.lt.s32.totalorder %s23, 1
        %s1439 = scalar_select %p1438, %s23, 1
        %p1440 = scmp.lt.s32.totalorder %s1437, 15
        %s1441 = scalar_select %p1440, %s1437, 15
        %s1442 = smul.addr %s1441, 2
        %s1443 = smul.addr %s1439, 32
        %s1444 = sadd.s32 %s1442, %s1443
        %s1445 = smul.addr %s1444, 8
        %s1446 = scalar_lea.vmem %s6, %s1445
      $region64: #{resconv_forward.1} parent=59 // pred_fallthru
        _
    $region60: #{resconv_forward.1} parent=5 // pred_fallthru
      _
  $region6: #{resconv_forward.1} parent=0 // loop_footer
    %s16 = sadd.s32 1, %s12
  $region7: #{resconv_forward.1} parent=0 // loop_footer_branch
    %11 = sbr.rel target = $region3
  $region8: #{resconv_forward.1} parent=0 // loop_exit
    _

</llo_original>
